<compile_context>
chip_gen: v7x
topology: tpu7x:2x2x1
jax: 0.10.0
libtpu: 0.0.40
codegen_flags: <defaults>
</compile_context>

<pallas_src>
import functools

import jax
import jax.numpy as jnp
from jax.experimental import pallas as pl
from jax.experimental.pallas import tpu as pltpu


# ----------------------------- Pallas kernel ------------------------------- #

def _encoder_kernel(num_layers, B, T, H, *refs):
    # refs layout:
    #   x_ref   : (T*B, Din)   time-major flattened input
    #   ctx_ref : (B, C)
    #   wc_ref  : (C, H)       cond2hidden weight (pre-transposed)
    #   bc_ref  : (1, H)       cond2hidden bias
    #   per layer l: wih (Din_l, 4H), whh (H, 4H), b (1, 4H)   [gate order i,f,g,o]
    #   out_ref : (B, T*H)     batch-first row-major output (== (B, T, H))
    x_ref, ctx_ref, wc_ref, bc_ref = refs[:4]
    layer_refs = refs[4:4 + 3 * num_layers]
    out_ref = refs[4 + 3 * num_layers]

    # cond2hidden: h0 shared by every layer (PyTorch repeats it num_layers times).
    h0 = (
        jnp.dot(ctx_ref[...], wc_ref[...], preferred_element_type=jnp.float32)
        + bc_ref[...]
    )  # (B, H)

    seq = x_ref[...]  # (T*B, Din), time-major

    hs = []
    for l in range(num_layers):
        wih = layer_refs[3 * l][...]      # (Din_l, 4H)
        whh = layer_refs[3 * l + 1][...]  # (H, 4H)
        b = layer_refs[3 * l + 2][...]    # (1, 4H)

        # Batched input projection for all timesteps, bias folded in.
        xg = jnp.dot(seq, wih, preferred_element_type=jnp.float32) + b  # (T*B, 4H)

        h = h0
        c = jnp.zeros((B, H), jnp.float32)
        hs = []
        for t in range(T):  # fully unrolled: T is static
            gates = xg[t * B:(t + 1) * B, :] + jnp.dot(
                h, whh, preferred_element_type=jnp.float32
            )  # (B, 4H)
            # Full-vreg EUP calls, then static lane slices for i/f/g/o.
            sig = jax.nn.sigmoid(gates)
            tnh = jnp.tanh(gates)
            i = sig[:, 0:H]
            f = sig[:, H:2 * H]
            g = tnh[:, 2 * H:3 * H]
            o = sig[:, 3 * H:4 * H]
            c = f * c + i * g
            h = o * jnp.tanh(c)
            hs.append(h)

        # Time-major (T*B, H) input for the next layer; stays in vregs/VMEM.
        seq = jnp.concatenate(hs, axis=0)

    # Single lane-dense store: (B, T*H) row-major == batch-first (B, T, H).
    out_ref[...] = jnp.concatenate(hs, axis=1)


# ------------------------------ Host wrapper ------------------------------- #

_VMEM_SPEC = pl.BlockSpec(memory_space=pltpu.MemorySpace.VMEM)


@functools.partial(jax.jit, static_argnames=("num_layers",))
def encoder_forward(x, context, params, num_layers):
    """Encoder.forward: returns LSTM outputs (B, T, hidden)."""
    B, T, Din = x.shape
    H = params["wc_t"].shape[1]

    # Layout plumbing in the wrapper: time-major flattened input.
    x_tm = jnp.transpose(x, (1, 0, 2)).reshape(T * B, Din)

    operands = [x_tm, context, params["wc_t"], params["bc"]]
    for l in range(num_layers):
        operands += [params["wih_t"][l], params["whh_t"][l], params["b"][l]]

    kernel = functools.partial(_encoder_kernel, num_layers, B, T, H)
    out_flat = pl.pallas_call(
        kernel,
        out_shape=jax.ShapeDtypeStruct((B, T * H), jnp.float32),
        in_specs=[_VMEM_SPEC] * len(operands),
        out_specs=_VMEM_SPEC,
    )(*operands)
    return out_flat.reshape(B, T, H)


# --------------------------- Parameter construction ------------------------ #

def init_params(key, input_size, hidden_size, num_layers, cond_dim):
    H = hidden_size
    k_lstm = 1.0 / jnp.sqrt(jnp.float32(H))
    k_lin = 1.0 / jnp.sqrt(jnp.float32(cond_dim))
    keys = jax.random.split(key, 2 + 4 * num_layers)

    # cond2hidden Linear: weight (H, cond_dim), bias (H,)
    wc = jax.random.uniform(keys[0], (H, cond_dim), jnp.float32, -k_lin, k_lin)
    bc = jax.random.uniform(keys[1], (1, H), jnp.float32, -k_lin, k_lin)

    wih_t, whh_t, b = [], [], []
    for l in range(num_layers):
        d_in = input_size if l == 0 else H
        k0, k1, k2, k3 = keys[2 + 4 * l: 6 + 4 * l]
        w_ih = jax.random.uniform(k0, (4 * H, d_in), jnp.float32, -k_lstm, k_lstm)
        w_hh = jax.random.uniform(k1, (4 * H, H), jnp.float32, -k_lstm, k_lstm)
        b_ih = jax.random.uniform(k2, (4 * H,), jnp.float32, -k_lstm, k_lstm)
        b_hh = jax.random.uniform(k3, (4 * H,), jnp.float32, -k_lstm, k_lstm)
        wih_t.append(w_ih.T)                      # (d_in, 4H)
        whh_t.append(w_hh.T)                      # (H, 4H)
        b.append((b_ih + b_hh)[None, :])          # (1, 4H)

    return {
        "wc_t": wc.T,      # (cond_dim, H)
        "bc": bc,          # (1, H)
        "wih_t": wih_t,    # list of (d_in, 4H)
        "whh_t": whh_t,    # list of (H, 4H)
        "b": b,            # list of (1, 4H)
    }


# ------------------------------ Pure-JAX reference ------------------------- #

def reference_forward(x, context, params, num_layers):
    h0 = context @ params["wc_t"] + params["bc"]
    B, T, _ = x.shape
    H = h0.shape[1]
    seq = x
    for l in range(num_layers):
        h = h0
        c = jnp.zeros((B, H), jnp.float32)
        outs = []
        for t in range(T):
            gates = (
                seq[:, t, :] @ params["wih_t"][l]
                + h @ params["whh_t"][l]
                + params["b"][l]
            )
            i = jax.nn.sigmoid(gates[:, 0:H])
            f = jax.nn.sigmoid(gates[:, H:2 * H])
            g = jnp.tanh(gates[:, 2 * H:3 * H])
            o = jax.nn.sigmoid(gates[:, 3 * H:4 * H])
            c = f * c + i * g
            h = o * jnp.tanh(c)
            outs.append(h)
        seq = jnp.stack(outs, axis=1)
    return seq


# ----------------------------------- Main ----------------------------------- #

if __name__ == "__main__":
    B, T = 2, 8
    INPUT_SIZE, HIDDEN_SIZE, NUM_LAYERS, COND_DIM = 16, 32, 2, 256

    root = jax.random.PRNGKey(0)
    kx, kc, kp = jax.random.split(root, 3)

    x = jax.random.normal(kx, (B, T, INPUT_SIZE), jnp.float32)
    context = jax.random.normal(kc, (B, COND_DIM), jnp.float32)
    params = init_params(kp, INPUT_SIZE, HIDDEN_SIZE, NUM_LAYERS, COND_DIM)

    out = encoder_forward(x, context, params, NUM_LAYERS)
    out = jax.block_until_ready(out)

    assert out.shape == (B, T, HIDDEN_SIZE), out.shape
    ref = reference_forward(x, context, params, NUM_LAYERS)
    assert jnp.allclose(out, ref, atol=1e-4, rtol=1e-4), float(jnp.max(jnp.abs(out - ref)))

    print("KERNEL_OK")
</pallas_src>

<mosaic_0001>
module attributes {stable_mosaic.version = 11 : i64} {
  func.func @_encoder_kernel(%arg0: memref<16x16xf32, #tpu.memory_space<vmem>>, %arg1: memref<2x256xf32, #tpu.memory_space<vmem>>, %arg2: memref<256x32xf32, #tpu.memory_space<vmem>>, %arg3: memref<1x32xf32, #tpu.memory_space<vmem>>, %arg4: memref<16x128xf32, #tpu.memory_space<vmem>>, %arg5: memref<32x128xf32, #tpu.memory_space<vmem>>, %arg6: memref<1x128xf32, #tpu.memory_space<vmem>>, %arg7: memref<32x128xf32, #tpu.memory_space<vmem>>, %arg8: memref<32x128xf32, #tpu.memory_space<vmem>>, %arg9: memref<1x128xf32, #tpu.memory_space<vmem>>, %arg10: memref<2x256xf32, #tpu.memory_space<vmem>>) attributes {dimension_semantics = [], scalar_prefetch = 0 : i64, scratch_operands = 0 : i64, tpu.core_type = #tpu.core_type<tc>} {
    %c0 = arith.constant 0 : index
    %c0_0 = arith.constant 0 : index
    %0 = vector.load %arg1[%c0, %c0_0] : memref<2x256xf32, #tpu.memory_space<vmem>>, vector<2x256xf32>
    %c0_1 = arith.constant 0 : index
    %c0_2 = arith.constant 0 : index
    %1 = vector.load %arg2[%c0_1, %c0_2] : memref<256x32xf32, #tpu.memory_space<vmem>>, vector<256x32xf32>
    %cst = arith.constant dense<0.000000e+00> : vector<2x32xf32>
    %2 = tpu.matmul %0, %1, %cst {dimension_numbers = #tpu.dot_dimension_numbers<[1], [0], [0], [1], [0, 0, 1, 1], [], []>} : vector<2x256xf32>, vector<256x32xf32>, vector<2x32xf32> -> vector<2x32xf32>
    %c0_3 = arith.constant 0 : index
    %c0_4 = arith.constant 0 : index
    %3 = vector.load %arg3[%c0_3, %c0_4] : memref<1x32xf32, #tpu.memory_space<vmem>>, vector<1x32xf32>
    %4 = vector.broadcast %3 : vector<1x32xf32> to vector<2x32xf32>
    %5 = arith.addf %2, %4 : vector<2x32xf32>
    %c0_5 = arith.constant 0 : index
    %c0_6 = arith.constant 0 : index
    %6 = vector.load %arg0[%c0_5, %c0_6] : memref<16x16xf32, #tpu.memory_space<vmem>>, vector<16x16xf32>
    %c0_7 = arith.constant 0 : index
    %c0_8 = arith.constant 0 : index
    %7 = vector.load %arg4[%c0_7, %c0_8] : memref<16x128xf32, #tpu.memory_space<vmem>>, vector<16x128xf32>
    %c0_9 = arith.constant 0 : index
    %c0_10 = arith.constant 0 : index
    %8 = vector.load %arg5[%c0_9, %c0_10] : memref<32x128xf32, #tpu.memory_space<vmem>>, vector<32x128xf32>
    %c0_11 = arith.constant 0 : index
    %c0_12 = arith.constant 0 : index
    %9 = vector.load %arg6[%c0_11, %c0_12] : memref<1x128xf32, #tpu.memory_space<vmem>>, vector<1x128xf32>
    %cst_13 = arith.constant dense<0.000000e+00> : vector<16x128xf32>
    %10 = tpu.matmul %6, %7, %cst_13 {dimension_numbers = #tpu.dot_dimension_numbers<[1], [0], [0], [1], [0, 0, 1, 1], [], []>} : vector<16x16xf32>, vector<16x128xf32>, vector<16x128xf32> -> vector<16x128xf32>
    %11 = vector.broadcast %9 : vector<1x128xf32> to vector<16x128xf32>
    %12 = arith.addf %10, %11 : vector<16x128xf32>
    %cst_14 = arith.constant 0.000000e+00 : f32
    %13 = vector.broadcast %cst_14 : f32 to vector<2x32xf32>
    %14 = vector.extract_strided_slice %12 {offsets = [0, 0], sizes = [2, 128], strides = [1, 1]} : vector<16x128xf32> to vector<2x128xf32>
    %cst_15 = arith.constant dense<0.000000e+00> : vector<2x128xf32>
    %15 = tpu.matmul %5, %8, %cst_15 {dimension_numbers = #tpu.dot_dimension_numbers<[1], [0], [0], [1], [0, 0, 1, 1], [], []>} : vector<2x32xf32>, vector<32x128xf32>, vector<2x128xf32> -> vector<2x128xf32>
    %16 = arith.addf %14, %15 : vector<2x128xf32>
    %17 = arith.negf %16 : vector<2x128xf32>
    %18 = math.exp %17 : vector<2x128xf32>
    %cst_16 = arith.constant 1.000000e+00 : f32
    %19 = vector.broadcast %cst_16 : f32 to vector<2x128xf32>
    %20 = arith.addf %19, %18 : vector<2x128xf32>
    %21 = arith.divf %19, %20 : vector<2x128xf32>
    %22 = math.tanh %16 : vector<2x128xf32>
    %23 = vector.extract_strided_slice %21 {offsets = [0, 0], sizes = [2, 32], strides = [1, 1]} : vector<2x128xf32> to vector<2x32xf32>
    %24 = vector.extract_strided_slice %21 {offsets = [0, 32], sizes = [2, 32], strides = [1, 1]} : vector<2x128xf32> to vector<2x32xf32>
    %25 = vector.extract_strided_slice %22 {offsets = [0, 64], sizes = [2, 32], strides = [1, 1]} : vector<2x128xf32> to vector<2x32xf32>
    %26 = vector.extract_strided_slice %21 {offsets = [0, 96], sizes = [2, 32], strides = [1, 1]} : vector<2x128xf32> to vector<2x32xf32>
    %27 = arith.mulf %24, %13 : vector<2x32xf32>
    %28 = arith.mulf %23, %25 : vector<2x32xf32>
    %29 = arith.addf %27, %28 : vector<2x32xf32>
    %30 = math.tanh %29 : vector<2x32xf32>
    %31 = arith.mulf %26, %30 : vector<2x32xf32>
    %32 = vector.extract_strided_slice %12 {offsets = [2, 0], sizes = [2, 128], strides = [1, 1]} : vector<16x128xf32> to vector<2x128xf32>
    %cst_17 = arith.constant dense<0.000000e+00> : vector<2x128xf32>
    %33 = tpu.matmul %31, %8, %cst_17 {dimension_numbers = #tpu.dot_dimension_numbers<[1], [0], [0], [1], [0, 0, 1, 1], [], []>} : vector<2x32xf32>, vector<32x128xf32>, vector<2x128xf32> -> vector<2x128xf32>
    %34 = arith.addf %32, %33 : vector<2x128xf32>
    %35 = arith.negf %34 : vector<2x128xf32>
    %36 = math.exp %35 : vector<2x128xf32>
    %cst_18 = arith.constant 1.000000e+00 : f32
    %37 = vector.broadcast %cst_18 : f32 to vector<2x128xf32>
    %38 = arith.addf %37, %36 : vector<2x128xf32>
    %39 = arith.divf %37, %38 : vector<2x128xf32>
    %40 = math.tanh %34 : vector<2x128xf32>
    %41 = vector.extract_strided_slice %39 {offsets = [0, 0], sizes = [2, 32], strides = [1, 1]} : vector<2x128xf32> to vector<2x32xf32>
    %42 = vector.extract_strided_slice %39 {offsets = [0, 32], sizes = [2, 32], strides = [1, 1]} : vector<2x128xf32> to vector<2x32xf32>
    %43 = vector.extract_strided_slice %40 {offsets = [0, 64], sizes = [2, 32], strides = [1, 1]} : vector<2x128xf32> to vector<2x32xf32>
    %44 = vector.extract_strided_slice %39 {offsets = [0, 96], sizes = [2, 32], strides = [1, 1]} : vector<2x128xf32> to vector<2x32xf32>
    %45 = arith.mulf %42, %29 : vector<2x32xf32>
    %46 = arith.mulf %41, %43 : vector<2x32xf32>
    %47 = arith.addf %45, %46 : vector<2x32xf32>
    %48 = math.tanh %47 : vector<2x32xf32>
    %49 = arith.mulf %44, %48 : vector<2x32xf32>
    %50 = vector.extract_strided_slice %12 {offsets = [4, 0], sizes = [2, 128], strides = [1, 1]} : vector<16x128xf32> to vector<2x128xf32>
    %cst_19 = arith.constant dense<0.000000e+00> : vector<2x128xf32>
    %51 = tpu.matmul %49, %8, %cst_19 {dimension_numbers = #tpu.dot_dimension_numbers<[1], [0], [0], [1], [0, 0, 1, 1], [], []>} : vector<2x32xf32>, vector<32x128xf32>, vector<2x128xf32> -> vector<2x128xf32>
    %52 = arith.addf %50, %51 : vector<2x128xf32>
    %53 = arith.negf %52 : vector<2x128xf32>
    %54 = math.exp %53 : vector<2x128xf32>
    %cst_20 = arith.constant 1.000000e+00 : f32
    %55 = vector.broadcast %cst_20 : f32 to vector<2x128xf32>
    %56 = arith.addf %55, %54 : vector<2x128xf32>
    %57 = arith.divf %55, %56 : vector<2x128xf32>
    %58 = math.tanh %52 : vector<2x128xf32>
    %59 = vector.extract_strided_slice %57 {offsets = [0, 0], sizes = [2, 32], strides = [1, 1]} : vector<2x128xf32> to vector<2x32xf32>
    %60 = vector.extract_strided_slice %57 {offsets = [0, 32], sizes = [2, 32], strides = [1, 1]} : vector<2x128xf32> to vector<2x32xf32>
    %61 = vector.extract_strided_slice %58 {offsets = [0, 64], sizes = [2, 32], strides = [1, 1]} : vector<2x128xf32> to vector<2x32xf32>
    %62 = vector.extract_strided_slice %57 {offsets = [0, 96], sizes = [2, 32], strides = [1, 1]} : vector<2x128xf32> to vector<2x32xf32>
    %63 = arith.mulf %60, %47 : vector<2x32xf32>
    %64 = arith.mulf %59, %61 : vector<2x32xf32>
    %65 = arith.addf %63, %64 : vector<2x32xf32>
    %66 = math.tanh %65 : vector<2x32xf32>
    %67 = arith.mulf %62, %66 : vector<2x32xf32>
    %68 = vector.extract_strided_slice %12 {offsets = [6, 0], sizes = [2, 128], strides = [1, 1]} : vector<16x128xf32> to vector<2x128xf32>
    %cst_21 = arith.constant dense<0.000000e+00> : vector<2x128xf32>
    %69 = tpu.matmul %67, %8, %cst_21 {dimension_numbers = #tpu.dot_dimension_numbers<[1], [0], [0], [1], [0, 0, 1, 1], [], []>} : vector<2x32xf32>, vector<32x128xf32>, vector<2x128xf32> -> vector<2x128xf32>
    %70 = arith.addf %68, %69 : vector<2x128xf32>
    %71 = arith.negf %70 : vector<2x128xf32>
    %72 = math.exp %71 : vector<2x128xf32>
    %cst_22 = arith.constant 1.000000e+00 : f32
    %73 = vector.broadcast %cst_22 : f32 to vector<2x128xf32>
    %74 = arith.addf %73, %72 : vector<2x128xf32>
    %75 = arith.divf %73, %74 : vector<2x128xf32>
    %76 = math.tanh %70 : vector<2x128xf32>
    %77 = vector.extract_strided_slice %75 {offsets = [0, 0], sizes = [2, 32], strides = [1, 1]} : vector<2x128xf32> to vector<2x32xf32>
    %78 = vector.extract_strided_slice %75 {offsets = [0, 32], sizes = [2, 32], strides = [1, 1]} : vector<2x128xf32> to vector<2x32xf32>
    %79 = vector.extract_strided_slice %76 {offsets = [0, 64], sizes = [2, 32], strides = [1, 1]} : vector<2x128xf32> to vector<2x32xf32>
    %80 = vector.extract_strided_slice %75 {offsets = [0, 96], sizes = [2, 32], strides = [1, 1]} : vector<2x128xf32> to vector<2x32xf32>
    %81 = arith.mulf %78, %65 : vector<2x32xf32>
    %82 = arith.mulf %77, %79 : vector<2x32xf32>
    %83 = arith.addf %81, %82 : vector<2x32xf32>
    %84 = math.tanh %83 : vector<2x32xf32>
    %85 = arith.mulf %80, %84 : vector<2x32xf32>
    %86 = vector.extract_strided_slice %12 {offsets = [8, 0], sizes = [2, 128], strides = [1, 1]} : vector<16x128xf32> to vector<2x128xf32>
    %cst_23 = arith.constant dense<0.000000e+00> : vector<2x128xf32>
    %87 = tpu.matmul %85, %8, %cst_23 {dimension_numbers = #tpu.dot_dimension_numbers<[1], [0], [0], [1], [0, 0, 1, 1], [], []>} : vector<2x32xf32>, vector<32x128xf32>, vector<2x128xf32> -> vector<2x128xf32>
    %88 = arith.addf %86, %87 : vector<2x128xf32>
    %89 = arith.negf %88 : vector<2x128xf32>
    %90 = math.exp %89 : vector<2x128xf32>
    %cst_24 = arith.constant 1.000000e+00 : f32
    %91 = vector.broadcast %cst_24 : f32 to vector<2x128xf32>
    %92 = arith.addf %91, %90 : vector<2x128xf32>
    %93 = arith.divf %91, %92 : vector<2x128xf32>
    %94 = math.tanh %88 : vector<2x128xf32>
    %95 = vector.extract_strided_slice %93 {offsets = [0, 0], sizes = [2, 32], strides = [1, 1]} : vector<2x128xf32> to vector<2x32xf32>
    %96 = vector.extract_strided_slice %93 {offsets = [0, 32], sizes = [2, 32], strides = [1, 1]} : vector<2x128xf32> to vector<2x32xf32>
    %97 = vector.extract_strided_slice %94 {offsets = [0, 64], sizes = [2, 32], strides = [1, 1]} : vector<2x128xf32> to vector<2x32xf32>
    %98 = vector.extract_strided_slice %93 {offsets = [0, 96], sizes = [2, 32], strides = [1, 1]} : vector<2x128xf32> to vector<2x32xf32>
    %99 = arith.mulf %96, %83 : vector<2x32xf32>
    %100 = arith.mulf %95, %97 : vector<2x32xf32>
    %101 = arith.addf %99, %100 : vector<2x32xf32>
    %102 = math.tanh %101 : vector<2x32xf32>
    %103 = arith.mulf %98, %102 : vector<2x32xf32>
    %104 = vector.extract_strided_slice %12 {offsets = [10, 0], sizes = [2, 128], strides = [1, 1]} : vector<16x128xf32> to vector<2x128xf32>
    %cst_25 = arith.constant dense<0.000000e+00> : vector<2x128xf32>
    %105 = tpu.matmul %103, %8, %cst_25 {dimension_numbers = #tpu.dot_dimension_numbers<[1], [0], [0], [1], [0, 0, 1, 1], [], []>} : vector<2x32xf32>, vector<32x128xf32>, vector<2x128xf32> -> vector<2x128xf32>
    %106 = arith.addf %104, %105 : vector<2x128xf32>
    %107 = arith.negf %106 : vector<2x128xf32>
    %108 = math.exp %107 : vector<2x128xf32>
    %cst_26 = arith.constant 1.000000e+00 : f32
    %109 = vector.broadcast %cst_26 : f32 to vector<2x128xf32>
    %110 = arith.addf %109, %108 : vector<2x128xf32>
    %111 = arith.divf %109, %110 : vector<2x128xf32>
    %112 = math.tanh %106 : vector<2x128xf32>
    %113 = vector.extract_strided_slice %111 {offsets = [0, 0], sizes = [2, 32], strides = [1, 1]} : vector<2x128xf32> to vector<2x32xf32>
    %114 = vector.extract_strided_slice %111 {offsets = [0, 32], sizes = [2, 32], strides = [1, 1]} : vector<2x128xf32> to vector<2x32xf32>
    %115 = vector.extract_strided_slice %112 {offsets = [0, 64], sizes = [2, 32], strides = [1, 1]} : vector<2x128xf32> to vector<2x32xf32>
    %116 = vector.extract_strided_slice %111 {offsets = [0, 96], sizes = [2, 32], strides = [1, 1]} : vector<2x128xf32> to vector<2x32xf32>
    %117 = arith.mulf %114, %101 : vector<2x32xf32>
    %118 = arith.mulf %113, %115 : vector<2x32xf32>
    %119 = arith.addf %117, %118 : vector<2x32xf32>
    %120 = math.tanh %119 : vector<2x32xf32>
    %121 = arith.mulf %116, %120 : vector<2x32xf32>
    %122 = vector.extract_strided_slice %12 {offsets = [12, 0], sizes = [2, 128], strides = [1, 1]} : vector<16x128xf32> to vector<2x128xf32>
    %cst_27 = arith.constant dense<0.000000e+00> : vector<2x128xf32>
    %123 = tpu.matmul %121, %8, %cst_27 {dimension_numbers = #tpu.dot_dimension_numbers<[1], [0], [0], [1], [0, 0, 1, 1], [], []>} : vector<2x32xf32>, vector<32x128xf32>, vector<2x128xf32> -> vector<2x128xf32>
    %124 = arith.addf %122, %123 : vector<2x128xf32>
    %125 = arith.negf %124 : vector<2x128xf32>
    %126 = math.exp %125 : vector<2x128xf32>
    %cst_28 = arith.constant 1.000000e+00 : f32
    %127 = vector.broadcast %cst_28 : f32 to vector<2x128xf32>
    %128 = arith.addf %127, %126 : vector<2x128xf32>
    %129 = arith.divf %127, %128 : vector<2x128xf32>
    %130 = math.tanh %124 : vector<2x128xf32>
    %131 = vector.extract_strided_slice %129 {offsets = [0, 0], sizes = [2, 32], strides = [1, 1]} : vector<2x128xf32> to vector<2x32xf32>
    %132 = vector.extract_strided_slice %129 {offsets = [0, 32], sizes = [2, 32], strides = [1, 1]} : vector<2x128xf32> to vector<2x32xf32>
    %133 = vector.extract_strided_slice %130 {offsets = [0, 64], sizes = [2, 32], strides = [1, 1]} : vector<2x128xf32> to vector<2x32xf32>
    %134 = vector.extract_strided_slice %129 {offsets = [0, 96], sizes = [2, 32], strides = [1, 1]} : vector<2x128xf32> to vector<2x32xf32>
    %135 = arith.mulf %132, %119 : vector<2x32xf32>
    %136 = arith.mulf %131, %133 : vector<2x32xf32>
    %137 = arith.addf %135, %136 : vector<2x32xf32>
    %138 = math.tanh %137 : vector<2x32xf32>
    %139 = arith.mulf %134, %138 : vector<2x32xf32>
    %140 = vector.extract_strided_slice %12 {offsets = [14, 0], sizes = [2, 128], strides = [1, 1]} : vector<16x128xf32> to vector<2x128xf32>
    %cst_29 = arith.constant dense<0.000000e+00> : vector<2x128xf32>
    %141 = tpu.matmul %139, %8, %cst_29 {dimension_numbers = #tpu.dot_dimension_numbers<[1], [0], [0], [1], [0, 0, 1, 1], [], []>} : vector<2x32xf32>, vector<32x128xf32>, vector<2x128xf32> -> vector<2x128xf32>
    %142 = arith.addf %140, %141 : vector<2x128xf32>
    %143 = arith.negf %142 : vector<2x128xf32>
    %144 = math.exp %143 : vector<2x128xf32>
    %cst_30 = arith.constant 1.000000e+00 : f32
    %145 = vector.broadcast %cst_30 : f32 to vector<2x128xf32>
    %146 = arith.addf %145, %144 : vector<2x128xf32>
    %147 = arith.divf %145, %146 : vector<2x128xf32>
    %148 = math.tanh %142 : vector<2x128xf32>
    %149 = vector.extract_strided_slice %147 {offsets = [0, 0], sizes = [2, 32], strides = [1, 1]} : vector<2x128xf32> to vector<2x32xf32>
    %150 = vector.extract_strided_slice %147 {offsets = [0, 32], sizes = [2, 32], strides = [1, 1]} : vector<2x128xf32> to vector<2x32xf32>
    %151 = vector.extract_strided_slice %148 {offsets = [0, 64], sizes = [2, 32], strides = [1, 1]} : vector<2x128xf32> to vector<2x32xf32>
    %152 = vector.extract_strided_slice %147 {offsets = [0, 96], sizes = [2, 32], strides = [1, 1]} : vector<2x128xf32> to vector<2x32xf32>
    %153 = arith.mulf %150, %137 : vector<2x32xf32>
    %154 = arith.mulf %149, %151 : vector<2x32xf32>
    %155 = arith.addf %153, %154 : vector<2x32xf32>
    %156 = math.tanh %155 : vector<2x32xf32>
    %157 = arith.mulf %152, %156 : vector<2x32xf32>
    %158 = tpu.concatenate %31, %49, %67, %85, %103, %121, %139, %157 in 0 : vector<2x32xf32>, vector<2x32xf32>, vector<2x32xf32>, vector<2x32xf32>, vector<2x32xf32>, vector<2x32xf32>, vector<2x32xf32>, vector<2x32xf32> -> vector<16x32xf32>
    %c0_31 = arith.constant 0 : index
    %c0_32 = arith.constant 0 : index
    %159 = vector.load %arg7[%c0_31, %c0_32] : memref<32x128xf32, #tpu.memory_space<vmem>>, vector<32x128xf32>
    %c0_33 = arith.constant 0 : index
    %c0_34 = arith.constant 0 : index
    %160 = vector.load %arg8[%c0_33, %c0_34] : memref<32x128xf32, #tpu.memory_space<vmem>>, vector<32x128xf32>
    %c0_35 = arith.constant 0 : index
    %c0_36 = arith.constant 0 : index
    %161 = vector.load %arg9[%c0_35, %c0_36] : memref<1x128xf32, #tpu.memory_space<vmem>>, vector<1x128xf32>
    %cst_37 = arith.constant dense<0.000000e+00> : vector<16x128xf32>
    %162 = tpu.matmul %158, %159, %cst_37 {dimension_numbers = #tpu.dot_dimension_numbers<[1], [0], [0], [1], [0, 0, 1, 1], [], []>} : vector<16x32xf32>, vector<32x128xf32>, vector<16x128xf32> -> vector<16x128xf32>
    %163 = vector.broadcast %161 : vector<1x128xf32> to vector<16x128xf32>
    %164 = arith.addf %162, %163 : vector<16x128xf32>
    %cst_38 = arith.constant 0.000000e+00 : f32
    %165 = vector.broadcast %cst_38 : f32 to vector<2x32xf32>
    %166 = vector.extract_strided_slice %164 {offsets = [0, 0], sizes = [2, 128], strides = [1, 1]} : vector<16x128xf32> to vector<2x128xf32>
    %cst_39 = arith.constant dense<0.000000e+00> : vector<2x128xf32>
    %167 = tpu.matmul %5, %160, %cst_39 {dimension_numbers = #tpu.dot_dimension_numbers<[1], [0], [0], [1], [0, 0, 1, 1], [], []>} : vector<2x32xf32>, vector<32x128xf32>, vector<2x128xf32> -> vector<2x128xf32>
    %168 = arith.addf %166, %167 : vector<2x128xf32>
    %169 = arith.negf %168 : vector<2x128xf32>
    %170 = math.exp %169 : vector<2x128xf32>
    %cst_40 = arith.constant 1.000000e+00 : f32
    %171 = vector.broadcast %cst_40 : f32 to vector<2x128xf32>
    %172 = arith.addf %171, %170 : vector<2x128xf32>
    %173 = arith.divf %171, %172 : vector<2x128xf32>
    %174 = math.tanh %168 : vector<2x128xf32>
    %175 = vector.extract_strided_slice %173 {offsets = [0, 0], sizes = [2, 32], strides = [1, 1]} : vector<2x128xf32> to vector<2x32xf32>
    %176 = vector.extract_strided_slice %173 {offsets = [0, 32], sizes = [2, 32], strides = [1, 1]} : vector<2x128xf32> to vector<2x32xf32>
    %177 = vector.extract_strided_slice %174 {offsets = [0, 64], sizes = [2, 32], strides = [1, 1]} : vector<2x128xf32> to vector<2x32xf32>
    %178 = vector.extract_strided_slice %173 {offsets = [0, 96], sizes = [2, 32], strides = [1, 1]} : vector<2x128xf32> to vector<2x32xf32>
    %179 = arith.mulf %176, %165 : vector<2x32xf32>
    %180 = arith.mulf %175, %177 : vector<2x32xf32>
    %181 = arith.addf %179, %180 : vector<2x32xf32>
    %182 = math.tanh %181 : vector<2x32xf32>
    %183 = arith.mulf %178, %182 : vector<2x32xf32>
    %184 = vector.extract_strided_slice %164 {offsets = [2, 0], sizes = [2, 128], strides = [1, 1]} : vector<16x128xf32> to vector<2x128xf32>
    %cst_41 = arith.constant dense<0.000000e+00> : vector<2x128xf32>
    %185 = tpu.matmul %183, %160, %cst_41 {dimension_numbers = #tpu.dot_dimension_numbers<[1], [0], [0], [1], [0, 0, 1, 1], [], []>} : vector<2x32xf32>, vector<32x128xf32>, vector<2x128xf32> -> vector<2x128xf32>
    %186 = arith.addf %184, %185 : vector<2x128xf32>
    %187 = arith.negf %186 : vector<2x128xf32>
    %188 = math.exp %187 : vector<2x128xf32>
    %cst_42 = arith.constant 1.000000e+00 : f32
    %189 = vector.broadcast %cst_42 : f32 to vector<2x128xf32>
    %190 = arith.addf %189, %188 : vector<2x128xf32>
    %191 = arith.divf %189, %190 : vector<2x128xf32>
    %192 = math.tanh %186 : vector<2x128xf32>
    %193 = vector.extract_strided_slice %191 {offsets = [0, 0], sizes = [2, 32], strides = [1, 1]} : vector<2x128xf32> to vector<2x32xf32>
    %194 = vector.extract_strided_slice %191 {offsets = [0, 32], sizes = [2, 32], strides = [1, 1]} : vector<2x128xf32> to vector<2x32xf32>
    %195 = vector.extract_strided_slice %192 {offsets = [0, 64], sizes = [2, 32], strides = [1, 1]} : vector<2x128xf32> to vector<2x32xf32>
    %196 = vector.extract_strided_slice %191 {offsets = [0, 96], sizes = [2, 32], strides = [1, 1]} : vector<2x128xf32> to vector<2x32xf32>
    %197 = arith.mulf %194, %181 : vector<2x32xf32>
    %198 = arith.mulf %193, %195 : vector<2x32xf32>
    %199 = arith.addf %197, %198 : vector<2x32xf32>
    %200 = math.tanh %199 : vector<2x32xf32>
    %201 = arith.mulf %196, %200 : vector<2x32xf32>
    %202 = vector.extract_strided_slice %164 {offsets = [4, 0], sizes = [2, 128], strides = [1, 1]} : vector<16x128xf32> to vector<2x128xf32>
    %cst_43 = arith.constant dense<0.000000e+00> : vector<2x128xf32>
    %203 = tpu.matmul %201, %160, %cst_43 {dimension_numbers = #tpu.dot_dimension_numbers<[1], [0], [0], [1], [0, 0, 1, 1], [], []>} : vector<2x32xf32>, vector<32x128xf32>, vector<2x128xf32> -> vector<2x128xf32>
    %204 = arith.addf %202, %203 : vector<2x128xf32>
    %205 = arith.negf %204 : vector<2x128xf32>
    %206 = math.exp %205 : vector<2x128xf32>
    %cst_44 = arith.constant 1.000000e+00 : f32
    %207 = vector.broadcast %cst_44 : f32 to vector<2x128xf32>
    %208 = arith.addf %207, %206 : vector<2x128xf32>
    %209 = arith.divf %207, %208 : vector<2x128xf32>
    %210 = math.tanh %204 : vector<2x128xf32>
    %211 = vector.extract_strided_slice %209 {offsets = [0, 0], sizes = [2, 32], strides = [1, 1]} : vector<2x128xf32> to vector<2x32xf32>
    %212 = vector.extract_strided_slice %209 {offsets = [0, 32], sizes = [2, 32], strides = [1, 1]} : vector<2x128xf32> to vector<2x32xf32>
    %213 = vector.extract_strided_slice %210 {offsets = [0, 64], sizes = [2, 32], strides = [1, 1]} : vector<2x128xf32> to vector<2x32xf32>
    %214 = vector.extract_strided_slice %209 {offsets = [0, 96], sizes = [2, 32], strides = [1, 1]} : vector<2x128xf32> to vector<2x32xf32>
    %215 = arith.mulf %212, %199 : vector<2x32xf32>
    %216 = arith.mulf %211, %213 : vector<2x32xf32>
    %217 = arith.addf %215, %216 : vector<2x32xf32>
    %218 = math.tanh %217 : vector<2x32xf32>
    %219 = arith.mulf %214, %218 : vector<2x32xf32>
    %220 = vector.extract_strided_slice %164 {offsets = [6, 0], sizes = [2, 128], strides = [1, 1]} : vector<16x128xf32> to vector<2x128xf32>
    %cst_45 = arith.constant dense<0.000000e+00> : vector<2x128xf32>
    %221 = tpu.matmul %219, %160, %cst_45 {dimension_numbers = #tpu.dot_dimension_numbers<[1], [0], [0], [1], [0, 0, 1, 1], [], []>} : vector<2x32xf32>, vector<32x128xf32>, vector<2x128xf32> -> vector<2x128xf32>
    %222 = arith.addf %220, %221 : vector<2x128xf32>
    %223 = arith.negf %222 : vector<2x128xf32>
    %224 = math.exp %223 : vector<2x128xf32>
    %cst_46 = arith.constant 1.000000e+00 : f32
    %225 = vector.broadcast %cst_46 : f32 to vector<2x128xf32>
    %226 = arith.addf %225, %224 : vector<2x128xf32>
    %227 = arith.divf %225, %226 : vector<2x128xf32>
    %228 = math.tanh %222 : vector<2x128xf32>
    %229 = vector.extract_strided_slice %227 {offsets = [0, 0], sizes = [2, 32], strides = [1, 1]} : vector<2x128xf32> to vector<2x32xf32>
    %230 = vector.extract_strided_slice %227 {offsets = [0, 32], sizes = [2, 32], strides = [1, 1]} : vector<2x128xf32> to vector<2x32xf32>
    %231 = vector.extract_strided_slice %228 {offsets = [0, 64], sizes = [2, 32], strides = [1, 1]} : vector<2x128xf32> to vector<2x32xf32>
    %232 = vector.extract_strided_slice %227 {offsets = [0, 96], sizes = [2, 32], strides = [1, 1]} : vector<2x128xf32> to vector<2x32xf32>
    %233 = arith.mulf %230, %217 : vector<2x32xf32>
    %234 = arith.mulf %229, %231 : vector<2x32xf32>
    %235 = arith.addf %233, %234 : vector<2x32xf32>
    %236 = math.tanh %235 : vector<2x32xf32>
    %237 = arith.mulf %232, %236 : vector<2x32xf32>
    %238 = vector.extract_strided_slice %164 {offsets = [8, 0], sizes = [2, 128], strides = [1, 1]} : vector<16x128xf32> to vector<2x128xf32>
    %cst_47 = arith.constant dense<0.000000e+00> : vector<2x128xf32>
    %239 = tpu.matmul %237, %160, %cst_47 {dimension_numbers = #tpu.dot_dimension_numbers<[1], [0], [0], [1], [0, 0, 1, 1], [], []>} : vector<2x32xf32>, vector<32x128xf32>, vector<2x128xf32> -> vector<2x128xf32>
    %240 = arith.addf %238, %239 : vector<2x128xf32>
    %241 = arith.negf %240 : vector<2x128xf32>
    %242 = math.exp %241 : vector<2x128xf32>
    %cst_48 = arith.constant 1.000000e+00 : f32
    %243 = vector.broadcast %cst_48 : f32 to vector<2x128xf32>
    %244 = arith.addf %243, %242 : vector<2x128xf32>
    %245 = arith.divf %243, %244 : vector<2x128xf32>
    %246 = math.tanh %240 : vector<2x128xf32>
    %247 = vector.extract_strided_slice %245 {offsets = [0, 0], sizes = [2, 32], strides = [1, 1]} : vector<2x128xf32> to vector<2x32xf32>
    %248 = vector.extract_strided_slice %245 {offsets = [0, 32], sizes = [2, 32], strides = [1, 1]} : vector<2x128xf32> to vector<2x32xf32>
    %249 = vector.extract_strided_slice %246 {offsets = [0, 64], sizes = [2, 32], strides = [1, 1]} : vector<2x128xf32> to vector<2x32xf32>
    %250 = vector.extract_strided_slice %245 {offsets = [0, 96], sizes = [2, 32], strides = [1, 1]} : vector<2x128xf32> to vector<2x32xf32>
    %251 = arith.mulf %248, %235 : vector<2x32xf32>
    %252 = arith.mulf %247, %249 : vector<2x32xf32>
    %253 = arith.addf %251, %252 : vector<2x32xf32>
    %254 = math.tanh %253 : vector<2x32xf32>
    %255 = arith.mulf %250, %254 : vector<2x32xf32>
    %256 = vector.extract_strided_slice %164 {offsets = [10, 0], sizes = [2, 128], strides = [1, 1]} : vector<16x128xf32> to vector<2x128xf32>
    %cst_49 = arith.constant dense<0.000000e+00> : vector<2x128xf32>
    %257 = tpu.matmul %255, %160, %cst_49 {dimension_numbers = #tpu.dot_dimension_numbers<[1], [0], [0], [1], [0, 0, 1, 1], [], []>} : vector<2x32xf32>, vector<32x128xf32>, vector<2x128xf32> -> vector<2x128xf32>
    %258 = arith.addf %256, %257 : vector<2x128xf32>
    %259 = arith.negf %258 : vector<2x128xf32>
    %260 = math.exp %259 : vector<2x128xf32>
    %cst_50 = arith.constant 1.000000e+00 : f32
    %261 = vector.broadcast %cst_50 : f32 to vector<2x128xf32>
    %262 = arith.addf %261, %260 : vector<2x128xf32>
    %263 = arith.divf %261, %262 : vector<2x128xf32>
    %264 = math.tanh %258 : vector<2x128xf32>
    %265 = vector.extract_strided_slice %263 {offsets = [0, 0], sizes = [2, 32], strides = [1, 1]} : vector<2x128xf32> to vector<2x32xf32>
    %266 = vector.extract_strided_slice %263 {offsets = [0, 32], sizes = [2, 32], strides = [1, 1]} : vector<2x128xf32> to vector<2x32xf32>
    %267 = vector.extract_strided_slice %264 {offsets = [0, 64], sizes = [2, 32], strides = [1, 1]} : vector<2x128xf32> to vector<2x32xf32>
    %268 = vector.extract_strided_slice %263 {offsets = [0, 96], sizes = [2, 32], strides = [1, 1]} : vector<2x128xf32> to vector<2x32xf32>
    %269 = arith.mulf %266, %253 : vector<2x32xf32>
    %270 = arith.mulf %265, %267 : vector<2x32xf32>
    %271 = arith.addf %269, %270 : vector<2x32xf32>
    %272 = math.tanh %271 : vector<2x32xf32>
    %273 = arith.mulf %268, %272 : vector<2x32xf32>
    %274 = vector.extract_strided_slice %164 {offsets = [12, 0], sizes = [2, 128], strides = [1, 1]} : vector<16x128xf32> to vector<2x128xf32>
    %cst_51 = arith.constant dense<0.000000e+00> : vector<2x128xf32>
    %275 = tpu.matmul %273, %160, %cst_51 {dimension_numbers = #tpu.dot_dimension_numbers<[1], [0], [0], [1], [0, 0, 1, 1], [], []>} : vector<2x32xf32>, vector<32x128xf32>, vector<2x128xf32> -> vector<2x128xf32>
    %276 = arith.addf %274, %275 : vector<2x128xf32>
    %277 = arith.negf %276 : vector<2x128xf32>
    %278 = math.exp %277 : vector<2x128xf32>
    %cst_52 = arith.constant 1.000000e+00 : f32
    %279 = vector.broadcast %cst_52 : f32 to vector<2x128xf32>
    %280 = arith.addf %279, %278 : vector<2x128xf32>
    %281 = arith.divf %279, %280 : vector<2x128xf32>
    %282 = math.tanh %276 : vector<2x128xf32>
    %283 = vector.extract_strided_slice %281 {offsets = [0, 0], sizes = [2, 32], strides = [1, 1]} : vector<2x128xf32> to vector<2x32xf32>
    %284 = vector.extract_strided_slice %281 {offsets = [0, 32], sizes = [2, 32], strides = [1, 1]} : vector<2x128xf32> to vector<2x32xf32>
    %285 = vector.extract_strided_slice %282 {offsets = [0, 64], sizes = [2, 32], strides = [1, 1]} : vector<2x128xf32> to vector<2x32xf32>
    %286 = vector.extract_strided_slice %281 {offsets = [0, 96], sizes = [2, 32], strides = [1, 1]} : vector<2x128xf32> to vector<2x32xf32>
    %287 = arith.mulf %284, %271 : vector<2x32xf32>
    %288 = arith.mulf %283, %285 : vector<2x32xf32>
    %289 = arith.addf %287, %288 : vector<2x32xf32>
    %290 = math.tanh %289 : vector<2x32xf32>
    %291 = arith.mulf %286, %290 : vector<2x32xf32>
    %292 = vector.extract_strided_slice %164 {offsets = [14, 0], sizes = [2, 128], strides = [1, 1]} : vector<16x128xf32> to vector<2x128xf32>
    %cst_53 = arith.constant dense<0.000000e+00> : vector<2x128xf32>
    %293 = tpu.matmul %291, %160, %cst_53 {dimension_numbers = #tpu.dot_dimension_numbers<[1], [0], [0], [1], [0, 0, 1, 1], [], []>} : vector<2x32xf32>, vector<32x128xf32>, vector<2x128xf32> -> vector<2x128xf32>
    %294 = arith.addf %292, %293 : vector<2x128xf32>
    %295 = arith.negf %294 : vector<2x128xf32>
    %296 = math.exp %295 : vector<2x128xf32>
    %cst_54 = arith.constant 1.000000e+00 : f32
    %297 = vector.broadcast %cst_54 : f32 to vector<2x128xf32>
    %298 = arith.addf %297, %296 : vector<2x128xf32>
    %299 = arith.divf %297, %298 : vector<2x128xf32>
    %300 = math.tanh %294 : vector<2x128xf32>
    %301 = vector.extract_strided_slice %299 {offsets = [0, 0], sizes = [2, 32], strides = [1, 1]} : vector<2x128xf32> to vector<2x32xf32>
    %302 = vector.extract_strided_slice %299 {offsets = [0, 32], sizes = [2, 32], strides = [1, 1]} : vector<2x128xf32> to vector<2x32xf32>
    %303 = vector.extract_strided_slice %300 {offsets = [0, 64], sizes = [2, 32], strides = [1, 1]} : vector<2x128xf32> to vector<2x32xf32>
    %304 = vector.extract_strided_slice %299 {offsets = [0, 96], sizes = [2, 32], strides = [1, 1]} : vector<2x128xf32> to vector<2x32xf32>
    %305 = arith.mulf %302, %289 : vector<2x32xf32>
    %306 = arith.mulf %301, %303 : vector<2x32xf32>
    %307 = arith.addf %305, %306 : vector<2x32xf32>
    %308 = math.tanh %307 : vector<2x32xf32>
    %309 = arith.mulf %304, %308 : vector<2x32xf32>
    %310 = tpu.concatenate %183, %201, %219, %237, %255, %273, %291, %309 in 1 : vector<2x32xf32>, vector<2x32xf32>, vector<2x32xf32>, vector<2x32xf32>, vector<2x32xf32>, vector<2x32xf32>, vector<2x32xf32>, vector<2x32xf32> -> vector<2x256xf32>
    %c0_55 = arith.constant 0 : index
    %c0_56 = arith.constant 0 : index
    %311 = vector.load %arg10[%c0_55, %c0_56] : memref<2x256xf32, #tpu.memory_space<vmem>>, vector<2x256xf32>
    tpu.vector_store %arg10[%c0_55, %c0_56], %310 {strides = array<i32>} : memref<2x256xf32, #tpu.memory_space<vmem>>, vector<2x256xf32>,
    return
  }
}

</mosaic_0001>

<llo_original>
// kernel: encoder_forward.1
$region0: #{encoder_forward.1}
  #allocation0 [shape = 'u32[]', space=smem, size = 0x4, offset = 0x4, fixed_abs, tag = 'smem constant byte address 0x4 - core index']
  #allocation1 [shape = 'u32[144,128]{1,0:T(1,128)}', space=vmem, size = 0x12000, scoped, tag = 'internal scratch']
  %s0 = inlined_call_operand.vmem [shape: f32[16,16], index: 0, kind: input, shape index: {}]
  %s1 = inlined_call_operand.vmem [shape: f32[2,256], index: 1, kind: input, shape index: {}]
  %s2 = inlined_call_operand.vmem [shape: f32[256,32], index: 2, kind: input, shape index: {}]
  %s3 = inlined_call_operand.vmem [shape: f32[1,32], index: 3, kind: input, shape index: {}]
  %s4 = inlined_call_operand.vmem [shape: f32[16,128], index: 4, kind: input, shape index: {}]
  %s5 = inlined_call_operand.vmem [shape: f32[32,128], index: 5, kind: input, shape index: {}]
  %s6 = inlined_call_operand.vmem [shape: f32[1,128], index: 6, kind: input, shape index: {}]
  %s7 = inlined_call_operand.vmem [shape: f32[32,128], index: 7, kind: input, shape index: {}]
  %s8 = inlined_call_operand.vmem [shape: f32[32,128], index: 8, kind: input, shape index: {}]
  %s9 = inlined_call_operand.vmem [shape: f32[1,128], index: 9, kind: input, shape index: {}]
  %s10 = inlined_call_operand.vmem [shape: f32[2,256], index: 10, kind: output, shape index: {}]
  %s11 = sld [smem:[#allocation0]]
  $region50: #{encoder_forward.1} parent=0
    _
  %s13 = ssub.s32 1, %s11
  %s14 = scalar_select 0, %s13, %s11
  // Predicated region
  $region2: #{encoder_forward.1} parent=0 // pred_check
    _
  $region3: #{encoder_forward.1} parent=0 // pred_check_branch
    %16 = sbr.rel (0) target = $region5
  $region4: #{encoder_forward.1} parent=0 // pred_region
    _
  $region5: #{encoder_forward.1} parent=0 // pred_fallthru
    _
  // Predicated region
  $region6: #{encoder_forward.1} parent=0 // pred_check
    _
  $region7: #{encoder_forward.1} parent=0 // pred_check_branch
    %18 = sbr.rel (0) target = $region9
  $region8: #{encoder_forward.1} parent=0 // pred_region
    _
  $region9: #{encoder_forward.1} parent=0 // pred_fallthru
    _
  // Predicated region
  $region10: #{encoder_forward.1} parent=0 // pred_check
    _
  $region11: #{encoder_forward.1} parent=0 // pred_check_branch
    %20 = sbr.rel (0) target = $region13
  $region12: #{encoder_forward.1} parent=0 // pred_region
    _
  $region13: #{encoder_forward.1} parent=0 // pred_fallthru
    _
  // Predicated region
  $region14: #{encoder_forward.1} parent=0 // pred_check
    _
  $region15: #{encoder_forward.1} parent=0 // pred_check_branch
    %22 = sbr.rel (0) target = $region17
  $region16: #{encoder_forward.1} parent=0 // pred_region
    _
  $region17: #{encoder_forward.1} parent=0 // pred_fallthru
    _
  // Predicated region
  $region18: #{encoder_forward.1} parent=0 // pred_check
    _
  $region19: #{encoder_forward.1} parent=0 // pred_check_branch
    %24 = sbr.rel (0) target = $region21
  $region20: #{encoder_forward.1} parent=0 // pred_region
    _
  $region21: #{encoder_forward.1} parent=0 // pred_fallthru
    _
  // Predicated region
  $region22: #{encoder_forward.1} parent=0 // pred_check
    _
  $region23: #{encoder_forward.1} parent=0 // pred_check_branch
    %26 = sbr.rel (0) target = $region25
  $region24: #{encoder_forward.1} parent=0 // pred_region
    _
  $region25: #{encoder_forward.1} parent=0 // pred_fallthru
    _
  // Predicated region
  $region26: #{encoder_forward.1} parent=0 // pred_check
    _
  $region27: #{encoder_forward.1} parent=0 // pred_check_branch
    %28 = sbr.rel (0) target = $region29
  $region28: #{encoder_forward.1} parent=0 // pred_region
    _
  $region29: #{encoder_forward.1} parent=0 // pred_fallthru
    _
  // Predicated region
  $region30: #{encoder_forward.1} parent=0 // pred_check
    _
  $region31: #{encoder_forward.1} parent=0 // pred_check_branch
    %30 = sbr.rel (0) target = $region33
  $region32: #{encoder_forward.1} parent=0 // pred_region
    _
  $region33: #{encoder_forward.1} parent=0 // pred_fallthru
    _
  // Predicated region
  $region34: #{encoder_forward.1} parent=0 // pred_check
    _
  $region35: #{encoder_forward.1} parent=0 // pred_check_branch
    %32 = sbr.rel (0) target = $region37
  $region36: #{encoder_forward.1} parent=0 // pred_region
    _
  $region37: #{encoder_forward.1} parent=0 // pred_fallthru
    _
  // Predicated region
  $region38: #{encoder_forward.1} parent=0 // pred_check
    _
  $region39: #{encoder_forward.1} parent=0 // pred_check_branch
    %34 = sbr.rel (0) target = $region41
  $region40: #{encoder_forward.1} parent=0 // pred_region
    _
  $region41: #{encoder_forward.1} parent=0 // pred_fallthru
    _
  %v35 = vld [vmem:[%s1] sm:$0xf]
  %v36 = vld [vmem:[%s2] sm:$0xff]
  %v37 = vld [vmem:[%s2 + $0x8] sm:$0xff]
  %v38 = vld [vmem:[%s2 + $0x10] sm:$0xff]
  %v39 = vld [vmem:[%s2 + $0x18] sm:$0xff]
  %v40 = vld [vmem:[%s2 + $0x20] sm:$0xff]
  %v41 = vld [vmem:[%s2 + $0x28] sm:$0xff]
  %v42 = vld [vmem:[%s2 + $0x30] sm:$0xff]
  %v43 = vld [vmem:[%s2 + $0x38] sm:$0xff]
  %v44 = vld [vmem:[%s2 + $0x40] sm:$0xff]
  %v45 = vld [vmem:[%s2 + $0x48] sm:$0xff]
  %v46 = vld [vmem:[%s2 + $0x50] sm:$0xff]
  %v47 = vld [vmem:[%s2 + $0x58] sm:$0xff]
  %v48 = vld [vmem:[%s2 + $0x60] sm:$0xff]
  %v49 = vld [vmem:[%s2 + $0x68] sm:$0xff]
  %v50 = vld [vmem:[%s2 + $0x70] sm:$0xff]
  %v51 = vld [vmem:[%s2 + $0x78] sm:$0xff]
  %v52 = vld [vmem:[%s2 + $0x80] sm:$0xff]
  %v53 = vld [vmem:[%s2 + $0x88] sm:$0xff]
  %v54 = vld [vmem:[%s2 + $0x90] sm:$0xff]
  %v55 = vld [vmem:[%s2 + $0x98] sm:$0xff]
  %v56 = vld [vmem:[%s2 + $0xa0] sm:$0xff]
  %v57 = vld [vmem:[%s2 + $0xa8] sm:$0xff]
  %v58 = vld [vmem:[%s2 + $0xb0] sm:$0xff]
  %v59 = vld [vmem:[%s2 + $0xb8] sm:$0xff]
  %v60 = vld [vmem:[%s2 + $0xc0] sm:$0xff]
  %v61 = vld [vmem:[%s2 + $0xc8] sm:$0xff]
  %v62 = vld [vmem:[%s2 + $0xd0] sm:$0xff]
  %v63 = vld [vmem:[%s2 + $0xd8] sm:$0xff]
  %v64 = vld [vmem:[%s2 + $0xe0] sm:$0xff]
  %v65 = vld [vmem:[%s2 + $0xe8] sm:$0xff]
  %v66 = vld [vmem:[%s2 + $0xf0] sm:$0xff]
  %v67 = vld [vmem:[%s2 + $0xf8] sm:$0xff]
  %v68 = vld [vmem:[%s3] sm:$0x1]
  %v70 = vlaneseq
  %v71 = vshrl.u32 %v70, 7
  %v72 = vsub.s32 0, %v71
  %v73 = vrot.slane %v68, %v72
  %v77 = vunpack.c.l.s4 1983009808
  %v78 = vunpack.c.0.s8 %v77
  %v79 = vlaneseq
  %v80 = vshrl.u32 %v79, 7
  %v81 = vsub.s32 %v78, %v80
  %v82 = vrot.slane %v35, %v81
  %v83 = vcombine.high %v82, %v82
  %86 = vmatprep.subr.mxu0 0.0
  %87 = vmatpush1.msra.mxu0 %v36
  %88 = vmatprep.subr.mxu0 0.0
  %89 = vmatpush1.msra.mxu0 %v37
  %90 = vmatprep.subr.mxu0 0.0
  %91 = vmatpush1.msra.mxu0 %v38
  %92 = vmatprep.subr.mxu0 0.0
  %93 = vmatpush1.msra.mxu0 %v39
  %94 = vmatprep.subr.mxu0 0.0
  %95 = vmatpush1.msra.mxu0 %v40
  %96 = vmatprep.subr.mxu0 0.0
  %97 = vmatpush1.msra.mxu0 %v41
  %98 = vmatprep.subr.mxu0 0.0
  %99 = vmatpush1.msra.mxu0 %v42
  %100 = vmatprep.subr.mxu0 0.0
  %101 = vmatpush1.msra.mxu0 %v43
  %102 = vmatprep.subr.mxu0 0.0
  %103 = vmatpush1.msra.mxu0 %v44
  %104 = vmatprep.subr.mxu0 0.0
  %105 = vmatpush1.msra.mxu0 %v45
  %106 = vmatprep.subr.mxu0 0.0
  %107 = vmatpush1.msra.mxu0 %v46
  %108 = vmatprep.subr.mxu0 0.0
  %109 = vmatpush1.msra.mxu0 %v47
  %110 = vmatprep.subr.mxu0 0.0
  %111 = vmatpush1.msra.mxu0 %v48
  %112 = vmatprep.subr.mxu0 0.0
  %113 = vmatpush1.msra.mxu0 %v49
  %114 = vmatprep.subr.mxu0 0.0
  %115 = vmatpush1.msra.mxu0 %v50
  %116 = vmatprep.subr.mxu0 0.0
  %117 = vmatpush1.msra.mxu0 %v51
  %118 = vmatprep.subr.mxu0 0.0
  %119 = vmatpush1.msra.mxu0 %v52
  %120 = vmatprep.subr.mxu0 0.0
  %121 = vmatpush1.msra.mxu0 %v53
  %122 = vmatprep.subr.mxu0 0.0
  %123 = vmatpush1.msra.mxu0 %v54
  %124 = vmatprep.subr.mxu0 0.0
  %125 = vmatpush1.msra.mxu0 %v55
  %126 = vmatprep.subr.mxu0 0.0
  %127 = vmatpush1.msra.mxu0 %v56
  %128 = vmatprep.subr.mxu0 0.0
  %129 = vmatpush1.msra.mxu0 %v57
  %130 = vmatprep.subr.mxu0 0.0
  %131 = vmatpush1.msra.mxu0 %v58
  %132 = vmatprep.subr.mxu0 0.0
  %133 = vmatpush1.msra.mxu0 %v59
  %134 = vmatprep.subr.mxu0 0.0
  %135 = vmatpush1.msra.mxu0 %v60
  %136 = vmatprep.subr.mxu0 0.0
  %137 = vmatpush1.msra.mxu0 %v61
  %138 = vmatprep.subr.mxu0 0.0
  %139 = vmatpush1.msra.mxu0 %v62
  %140 = vmatprep.subr.mxu0 0.0
  %141 = vmatpush1.msra.mxu0 %v63
  %142 = vmatprep.subr.mxu0 0.0
  %143 = vmatpush1.msra.mxu0 %v64
  %144 = vmatprep.subr.mxu0 0.0
  %145 = vmatpush1.msra.mxu0 %v65
  %146 = vmatprep.subr.mxu0 0.0
  %147 = vmatpush1.msra.mxu0 %v66
  %148 = vmatprep.subr.mxu0 0.0
  %149 = vmatpush1.msra.mxu0 %v67
  %150 = vmatprep.mubr.f32.mxu0 %v83
  %151 = vmatmul.mubr.f32.gmra.mrb[0].mxu0 %v82
  %v152 = vpop.f32.mrb[0].mxu0
  %v153 = vadd.f32 %v73, %v152
  %v154 = vpop.f32.mrb[0].mxu0
  %155 = vdwg.mxu0
  %v156 = vld [vmem:[%s0] sm:$0xff]
  %v157 = vld [vmem:[%s0 + $0x8] sm:$0xff]
  %v158 = vld [vmem:[%s4] sm:$0xff]
  %v159 = vld [vmem:[%s4 + $0x8] sm:$0xff]
  %v160 = vld [vmem:[%s5] sm:$0xff]
  %v161 = vld [vmem:[%s5 + $0x8] sm:$0xff]
  %v162 = vld [vmem:[%s5 + $0x10] sm:$0xff]
  %v163 = vld [vmem:[%s5 + $0x18] sm:$0xff]
  %v164 = vld [vmem:[%s6] sm:$0x1]
  %v166 = vlaneseq
  %v167 = vshrl.u32 %v166, 7
  %v168 = vsub.s32 0, %v167
  %v169 = vrot.slane %v164, %v168
  %vm171 = vcmask 130048
  %v173 = vsel %vm171, %v156, 0
  %v176 = vsel %vm171, %v157, 0
  %178 = vmatprep.subr.mxu0 0.0
  %179 = vmatpush1.msra.mxu0 %v158
  %180 = vmatprep.subr.mxu0 0.0
  %181 = vmatpush1.msra.mxu0 %v159
  %182 = vmatprep.subr.mxu0 0.0
  %183 = vmatpush1.msra.mxu0 0.0
  %184 = vmatprep.subr.mxu0 0.0
  %185 = vmatpush1.msra.mxu0 0.0
  %186 = vmatprep.subr.mxu0 0.0
  %187 = vmatpush1.msra.mxu0 0.0
  %188 = vmatprep.subr.mxu0 0.0
  %189 = vmatpush1.msra.mxu0 0.0
  %190 = vmatprep.subr.mxu0 0.0
  %191 = vmatpush1.msra.mxu0 0.0
  %192 = vmatprep.subr.mxu0 0.0
  %193 = vmatpush1.msra.mxu0 0.0
  %194 = vmatprep.subr.mxu0 0.0
  %195 = vmatpush1.msra.mxu0 0.0
  %196 = vmatprep.subr.mxu0 0.0
  %197 = vmatpush1.msra.mxu0 0.0
  %198 = vmatprep.subr.mxu0 0.0
  %199 = vmatpush1.msra.mxu0 0.0
  %200 = vmatprep.subr.mxu0 0.0
  %201 = vmatpush1.msra.mxu0 0.0
  %202 = vmatprep.subr.mxu0 0.0
  %203 = vmatpush1.msra.mxu0 0.0
  %204 = vmatprep.subr.mxu0 0.0
  %205 = vmatpush1.msra.mxu0 0.0
  %206 = vmatprep.subr.mxu0 0.0
  %207 = vmatpush1.msra.mxu0 0.0
  %208 = vmatprep.subr.mxu0 0.0
  %209 = vmatpush1.msra.mxu0 0.0
  %210 = vmatprep.subr.mxu0 0.0
  %211 = vmatpush1.msra.mxu0 0.0
  %212 = vmatprep.subr.mxu0 0.0
  %213 = vmatpush1.msra.mxu0 0.0
  %214 = vmatprep.subr.mxu0 0.0
  %215 = vmatpush1.msra.mxu0 0.0
  %216 = vmatprep.subr.mxu0 0.0
  %217 = vmatpush1.msra.mxu0 0.0
  %218 = vmatprep.subr.mxu0 0.0
  %219 = vmatpush1.msra.mxu0 0.0
  %220 = vmatprep.subr.mxu0 0.0
  %221 = vmatpush1.msra.mxu0 0.0
  %222 = vmatprep.subr.mxu0 0.0
  %223 = vmatpush1.msra.mxu0 0.0
  %224 = vmatprep.subr.mxu0 0.0
  %225 = vmatpush1.msra.mxu0 0.0
  %226 = vmatprep.subr.mxu0 0.0
  %227 = vmatpush1.msra.mxu0 0.0
  %228 = vmatprep.subr.mxu0 0.0
  %229 = vmatpush1.msra.mxu0 0.0
  %230 = vmatprep.subr.mxu0 0.0
  %231 = vmatpush1.msra.mxu0 0.0
  %232 = vmatprep.subr.mxu0 0.0
  %233 = vmatpush1.msra.mxu0 0.0
  %234 = vmatprep.subr.mxu0 0.0
  %235 = vmatpush1.msra.mxu0 0.0
  %236 = vmatprep.subr.mxu0 0.0
  %237 = vmatpush1.msra.mxu0 0.0
  %238 = vmatprep.subr.mxu0 0.0
  %239 = vmatpush1.msra.mxu0 0.0
  %240 = vmatprep.subr.mxu0 0.0
  %241 = vmatpush1.msra.mxu0 0.0
  %242 = vmatprep.mubr.f32.mxu0 0.0
  %243 = vmatmul.mubr.f32.gmra.mrb[0].mxu0 %v173
  %v244 = vpop.f32.mrb[0].mxu0
  %v245 = vadd.f32 %v169, %v244
  %v246 = vpop.f32.mrb[0].mxu0
  %247 = vmatprep.mubr.f32.mxu0 0.0
  %248 = vmatmul.mubr.f32.gmra.mrb[0].mxu0 %v176
  %v249 = vpop.f32.mrb[0].mxu0
  %v250 = vadd.f32 %v169, %v249
  %v251 = vpop.f32.mrb[0].mxu0
  %252 = vdwg.mxu0
  %vm253 = vcmask 261120
  %v255 = vsel %vm253, %v153, 0
  %257 = vmatprep.subr.mxu0 0.0
  %258 = vmatpush1.msra.mxu0 %v160
  %259 = vmatprep.subr.mxu0 0.0
  %260 = vmatpush1.msra.mxu0 %v161
  %261 = vmatprep.subr.mxu0 0.0
  %262 = vmatpush1.msra.mxu0 %v162
  %263 = vmatprep.subr.mxu0 0.0
  %264 = vmatpush1.msra.mxu0 %v163
  %265 = vmatprep.subr.mxu0 0.0
  %266 = vmatpush1.msra.mxu0 0.0
  %267 = vmatprep.subr.mxu0 0.0
  %268 = vmatpush1.msra.mxu0 0.0
  %269 = vmatprep.subr.mxu0 0.0
  %270 = vmatpush1.msra.mxu0 0.0
  %271 = vmatprep.subr.mxu0 0.0
  %272 = vmatpush1.msra.mxu0 0.0
  %273 = vmatprep.subr.mxu0 0.0
  %274 = vmatpush1.msra.mxu0 0.0
  %275 = vmatprep.subr.mxu0 0.0
  %276 = vmatpush1.msra.mxu0 0.0
  %277 = vmatprep.subr.mxu0 0.0
  %278 = vmatpush1.msra.mxu0 0.0
  %279 = vmatprep.subr.mxu0 0.0
  %280 = vmatpush1.msra.mxu0 0.0
  %281 = vmatprep.subr.mxu0 0.0
  %282 = vmatpush1.msra.mxu0 0.0
  %283 = vmatprep.subr.mxu0 0.0
  %284 = vmatpush1.msra.mxu0 0.0
  %285 = vmatprep.subr.mxu0 0.0
  %286 = vmatpush1.msra.mxu0 0.0
  %287 = vmatprep.subr.mxu0 0.0
  %288 = vmatpush1.msra.mxu0 0.0
  %289 = vmatprep.subr.mxu0 0.0
  %290 = vmatpush1.msra.mxu0 0.0
  %291 = vmatprep.subr.mxu0 0.0
  %292 = vmatpush1.msra.mxu0 0.0
  %293 = vmatprep.subr.mxu0 0.0
  %294 = vmatpush1.msra.mxu0 0.0
  %295 = vmatprep.subr.mxu0 0.0
  %296 = vmatpush1.msra.mxu0 0.0
  %297 = vmatprep.subr.mxu0 0.0
  %298 = vmatpush1.msra.mxu0 0.0
  %299 = vmatprep.subr.mxu0 0.0
  %300 = vmatpush1.msra.mxu0 0.0
  %301 = vmatprep.subr.mxu0 0.0
  %302 = vmatpush1.msra.mxu0 0.0
  %303 = vmatprep.subr.mxu0 0.0
  %304 = vmatpush1.msra.mxu0 0.0
  %305 = vmatprep.subr.mxu0 0.0
  %306 = vmatpush1.msra.mxu0 0.0
  %307 = vmatprep.subr.mxu0 0.0
  %308 = vmatpush1.msra.mxu0 0.0
  %309 = vmatprep.subr.mxu0 0.0
  %310 = vmatpush1.msra.mxu0 0.0
  %311 = vmatprep.subr.mxu0 0.0
  %312 = vmatpush1.msra.mxu0 0.0
  %313 = vmatprep.subr.mxu0 0.0
  %314 = vmatpush1.msra.mxu0 0.0
  %315 = vmatprep.subr.mxu0 0.0
  %316 = vmatpush1.msra.mxu0 0.0
  %317 = vmatprep.subr.mxu0 0.0
  %318 = vmatpush1.msra.mxu0 0.0
  %319 = vmatprep.subr.mxu0 0.0
  %320 = vmatpush1.msra.mxu0 0.0
  %321 = vmatprep.mubr.f32.mxu0 0.0
  %322 = vmatmul.mubr.f32.gmra.mrb[0].mxu0 %v255
  %v323 = vpop.f32.mrb[0].mxu0
  %v324 = vadd.f32 0.0, %v323
  %v325 = vpop.f32.mrb[0].mxu0
  %326 = vdwg.mxu0
  %v327 = vadd.f32 %v245, %v324
  %v328 = vxor.u32 %v327, 2147483648
  %v329 = vmul.f32 %v328, 1.442695
  %v330 = vpow.pop %v329
  %v331 = vadd.f32 %v330, 1.0
  %v332 = vrcp.pop %v331
  %v333 = vmul.f32 1.0, %v332
  %v334 = vtanh.pop %v327
  %v335 = vmul.f32 %v333, 0.0
  %337 = vrot.lane.b32.xlu0 %v334, 64
  %v338 = vpop.permute.xlu0 %337
  %v340 = vmul.f32 %v333, %v338
  %342 = vrot.lane.b32.xlu0 %v340, 32
  %v343 = vpop.permute.xlu0 %342
  %v345 = vadd.f32 %v335, %v343
  %v346 = vtanh.pop %v345
  %348 = vrot.lane.b32.xlu0 %v346, 64
  %v349 = vpop.permute.xlu0 %348
  %v351 = vmul.f32 %v333, %v349
  %353 = vrot.lane.b32.xlu0 %v351, 32
  %v354 = vpop.permute.xlu0 %353
  %v355 = vsel %vm253, %v354, 0
  %357 = vmatprep.subr.mxu0 0.0
  %358 = vmatpush1.msra.mxu0 %v160
  %359 = vmatprep.subr.mxu0 0.0
  %360 = vmatpush1.msra.mxu0 %v161
  %361 = vmatprep.subr.mxu0 0.0
  %362 = vmatpush1.msra.mxu0 %v162
  %363 = vmatprep.subr.mxu0 0.0
  %364 = vmatpush1.msra.mxu0 %v163
  %365 = vmatprep.subr.mxu0 0.0
  %366 = vmatpush1.msra.mxu0 0.0
  %367 = vmatprep.subr.mxu0 0.0
  %368 = vmatpush1.msra.mxu0 0.0
  %369 = vmatprep.subr.mxu0 0.0
  %370 = vmatpush1.msra.mxu0 0.0
  %371 = vmatprep.subr.mxu0 0.0
  %372 = vmatpush1.msra.mxu0 0.0
  %373 = vmatprep.subr.mxu0 0.0
  %374 = vmatpush1.msra.mxu0 0.0
  %375 = vmatprep.subr.mxu0 0.0
  %376 = vmatpush1.msra.mxu0 0.0
  %377 = vmatprep.subr.mxu0 0.0
  %378 = vmatpush1.msra.mxu0 0.0
  %379 = vmatprep.subr.mxu0 0.0
  %380 = vmatpush1.msra.mxu0 0.0
  %381 = vmatprep.subr.mxu0 0.0
  %382 = vmatpush1.msra.mxu0 0.0
  %383 = vmatprep.subr.mxu0 0.0
  %384 = vmatpush1.msra.mxu0 0.0
  %385 = vmatprep.subr.mxu0 0.0
  %386 = vmatpush1.msra.mxu0 0.0
  %387 = vmatprep.subr.mxu0 0.0
  %388 = vmatpush1.msra.mxu0 0.0
  %389 = vmatprep.subr.mxu0 0.0
  %390 = vmatpush1.msra.mxu0 0.0
  %391 = vmatprep.subr.mxu0 0.0
  %392 = vmatpush1.msra.mxu0 0.0
  %393 = vmatprep.subr.mxu0 0.0
  %394 = vmatpush1.msra.mxu0 0.0
  %395 = vmatprep.subr.mxu0 0.0
  %396 = vmatpush1.msra.mxu0 0.0
  %397 = vmatprep.subr.mxu0 0.0
  %398 = vmatpush1.msra.mxu0 0.0
  %399 = vmatprep.subr.mxu0 0.0
  %400 = vmatpush1.msra.mxu0 0.0
  %401 = vmatprep.subr.mxu0 0.0
  %402 = vmatpush1.msra.mxu0 0.0
  %403 = vmatprep.subr.mxu0 0.0
  %404 = vmatpush1.msra.mxu0 0.0
  %405 = vmatprep.subr.mxu0 0.0
  %406 = vmatpush1.msra.mxu0 0.0
  %407 = vmatprep.subr.mxu0 0.0
  %408 = vmatpush1.msra.mxu0 0.0
  %409 = vmatprep.subr.mxu0 0.0
  %410 = vmatpush1.msra.mxu0 0.0
  %411 = vmatprep.subr.mxu0 0.0
  %412 = vmatpush1.msra.mxu0 0.0
  %413 = vmatprep.subr.mxu0 0.0
  %414 = vmatpush1.msra.mxu0 0.0
  %415 = vmatprep.subr.mxu0 0.0
  %416 = vmatpush1.msra.mxu0 0.0
  %417 = vmatprep.subr.mxu0 0.0
  %418 = vmatpush1.msra.mxu0 0.0
  %419 = vmatprep.subr.mxu0 0.0
  %420 = vmatpush1.msra.mxu0 0.0
  %421 = vmatprep.mubr.f32.mxu0 0.0
  %422 = vmatmul.mubr.f32.gmra.mrb[0].mxu0 %v355
  %v423 = vpop.f32.mrb[0].mxu0
  %v424 = vadd.f32 0.0, %v423
  %v425 = vpop.f32.mrb[0].mxu0
  %426 = vdwg.mxu0
  %v428 = vrot.slane %v424, 6
  %v430 = vadd.f32 %v245, %v428
  %v431 = vxor.u32 %v430, 2147483648
  %v432 = vmul.f32 %v431, 1.442695
  %v433 = vpow.pop %v432
  %v434 = vadd.f32 %v433, 1.0
  %v435 = vrcp.pop %v434
  %v436 = vmul.f32 1.0, %v435
  %v437 = vtanh.pop %v430
  %v439 = vrot.slane %v345, 6
  %v441 = vmul.f32 %v436, %v439
  %443 = vrot.lane.b32.xlu0 %v437, 64
  %v444 = vpop.permute.xlu0 %443
  %v446 = vmul.f32 %v436, %v444
  %448 = vrot.lane.b32.xlu0 %v446, 32
  %v449 = vpop.permute.xlu0 %448
  %v451 = vadd.f32 %v441, %v449
  %v452 = vtanh.pop %v451
  %454 = vrot.lane.b32.xlu0 %v452, 64
  %v455 = vpop.permute.xlu0 %454
  %v457 = vmul.f32 %v436, %v455
  %v459 = vrot.slane %v457, 2
  %460 = vrot.lane.b32.xlu0 %v459, 32
  %v461 = vpop.permute.xlu0 %460
  %v462 = vsel %vm253, %v461, 0
  %464 = vmatprep.subr.mxu0 0.0
  %465 = vmatpush1.msra.mxu0 %v160
  %466 = vmatprep.subr.mxu0 0.0
  %467 = vmatpush1.msra.mxu0 %v161
  %468 = vmatprep.subr.mxu0 0.0
  %469 = vmatpush1.msra.mxu0 %v162
  %470 = vmatprep.subr.mxu0 0.0
  %471 = vmatpush1.msra.mxu0 %v163
  %472 = vmatprep.subr.mxu0 0.0
  %473 = vmatpush1.msra.mxu0 0.0
  %474 = vmatprep.subr.mxu0 0.0
  %475 = vmatpush1.msra.mxu0 0.0
  %476 = vmatprep.subr.mxu0 0.0
  %477 = vmatpush1.msra.mxu0 0.0
  %478 = vmatprep.subr.mxu0 0.0
  %479 = vmatpush1.msra.mxu0 0.0
  %480 = vmatprep.subr.mxu0 0.0
  %481 = vmatpush1.msra.mxu0 0.0
  %482 = vmatprep.subr.mxu0 0.0
  %483 = vmatpush1.msra.mxu0 0.0
  %484 = vmatprep.subr.mxu0 0.0
  %485 = vmatpush1.msra.mxu0 0.0
  %486 = vmatprep.subr.mxu0 0.0
  %487 = vmatpush1.msra.mxu0 0.0
  %488 = vmatprep.subr.mxu0 0.0
  %489 = vmatpush1.msra.mxu0 0.0
  %490 = vmatprep.subr.mxu0 0.0
  %491 = vmatpush1.msra.mxu0 0.0
  %492 = vmatprep.subr.mxu0 0.0
  %493 = vmatpush1.msra.mxu0 0.0
  %494 = vmatprep.subr.mxu0 0.0
  %495 = vmatpush1.msra.mxu0 0.0
  %496 = vmatprep.subr.mxu0 0.0
  %497 = vmatpush1.msra.mxu0 0.0
  %498 = vmatprep.subr.mxu0 0.0
  %499 = vmatpush1.msra.mxu0 0.0
  %500 = vmatprep.subr.mxu0 0.0
  %501 = vmatpush1.msra.mxu0 0.0
  %502 = vmatprep.subr.mxu0 0.0
  %503 = vmatpush1.msra.mxu0 0.0
  %504 = vmatprep.subr.mxu0 0.0
  %505 = vmatpush1.msra.mxu0 0.0
  %506 = vmatprep.subr.mxu0 0.0
  %507 = vmatpush1.msra.mxu0 0.0
  %508 = vmatprep.subr.mxu0 0.0
  %509 = vmatpush1.msra.mxu0 0.0
  %510 = vmatprep.subr.mxu0 0.0
  %511 = vmatpush1.msra.mxu0 0.0
  %512 = vmatprep.subr.mxu0 0.0
  %513 = vmatpush1.msra.mxu0 0.0
  %514 = vmatprep.subr.mxu0 0.0
  %515 = vmatpush1.msra.mxu0 0.0
  %516 = vmatprep.subr.mxu0 0.0
  %517 = vmatpush1.msra.mxu0 0.0
  %518 = vmatprep.subr.mxu0 0.0
  %519 = vmatpush1.msra.mxu0 0.0
  %520 = vmatprep.subr.mxu0 0.0
  %521 = vmatpush1.msra.mxu0 0.0
  %522 = vmatprep.subr.mxu0 0.0
  %523 = vmatpush1.msra.mxu0 0.0
  %524 = vmatprep.subr.mxu0 0.0
  %525 = vmatpush1.msra.mxu0 0.0
  %526 = vmatprep.subr.mxu0 0.0
  %527 = vmatpush1.msra.mxu0 0.0
  %528 = vmatprep.mubr.f32.mxu0 0.0
  %529 = vmatmul.mubr.f32.gmra.mrb[0].mxu0 %v462
  %v530 = vpop.f32.mrb[0].mxu0
  %v531 = vadd.f32 0.0, %v530
  %v532 = vpop.f32.mrb[0].mxu0
  %533 = vdwg.mxu0
  %v535 = vrot.slane %v531, 4
  %v537 = vadd.f32 %v245, %v535
  %v538 = vxor.u32 %v537, 2147483648
  %v539 = vmul.f32 %v538, 1.442695
  %v540 = vpow.pop %v539
  %v541 = vadd.f32 %v540, 1.0
  %v542 = vrcp.pop %v541
  %v543 = vmul.f32 1.0, %v542
  %v544 = vtanh.pop %v537
  %v546 = vrot.slane %v451, 6
  %v548 = vmul.f32 %v543, %v546
  %550 = vrot.lane.b32.xlu0 %v544, 64
  %v551 = vpop.permute.xlu0 %550
  %v553 = vmul.f32 %v543, %v551
  %555 = vrot.lane.b32.xlu0 %v553, 32
  %v556 = vpop.permute.xlu0 %555
  %v558 = vadd.f32 %v548, %v556
  %v559 = vtanh.pop %v558
  %561 = vrot.lane.b32.xlu0 %v559, 64
  %v562 = vpop.permute.xlu0 %561
  %v564 = vmul.f32 %v543, %v562
  %v566 = vrot.slane %v564, 4
  %567 = vrot.lane.b32.xlu0 %v566, 32
  %v568 = vpop.permute.xlu0 %567
  %v569 = vsel %vm253, %v568, 0
  %571 = vmatprep.subr.mxu0 0.0
  %572 = vmatpush1.msra.mxu0 %v160
  %573 = vmatprep.subr.mxu0 0.0
  %574 = vmatpush1.msra.mxu0 %v161
  %575 = vmatprep.subr.mxu0 0.0
  %576 = vmatpush1.msra.mxu0 %v162
  %577 = vmatprep.subr.mxu0 0.0
  %578 = vmatpush1.msra.mxu0 %v163
  %579 = vmatprep.subr.mxu0 0.0
  %580 = vmatpush1.msra.mxu0 0.0
  %581 = vmatprep.subr.mxu0 0.0
  %582 = vmatpush1.msra.mxu0 0.0
  %583 = vmatprep.subr.mxu0 0.0
  %584 = vmatpush1.msra.mxu0 0.0
  %585 = vmatprep.subr.mxu0 0.0
  %586 = vmatpush1.msra.mxu0 0.0
  %587 = vmatprep.subr.mxu0 0.0
  %588 = vmatpush1.msra.mxu0 0.0
  %589 = vmatprep.subr.mxu0 0.0
  %590 = vmatpush1.msra.mxu0 0.0
  %591 = vmatprep.subr.mxu0 0.0
  %592 = vmatpush1.msra.mxu0 0.0
  %593 = vmatprep.subr.mxu0 0.0
  %594 = vmatpush1.msra.mxu0 0.0
  %595 = vmatprep.subr.mxu0 0.0
  %596 = vmatpush1.msra.mxu0 0.0
  %597 = vmatprep.subr.mxu0 0.0
  %598 = vmatpush1.msra.mxu0 0.0
  %599 = vmatprep.subr.mxu0 0.0
  %600 = vmatpush1.msra.mxu0 0.0
  %601 = vmatprep.subr.mxu0 0.0
  %602 = vmatpush1.msra.mxu0 0.0
  %603 = vmatprep.subr.mxu0 0.0
  %604 = vmatpush1.msra.mxu0 0.0
  %605 = vmatprep.subr.mxu0 0.0
  %606 = vmatpush1.msra.mxu0 0.0
  %607 = vmatprep.subr.mxu0 0.0
  %608 = vmatpush1.msra.mxu0 0.0
  %609 = vmatprep.subr.mxu0 0.0
  %610 = vmatpush1.msra.mxu0 0.0
  %611 = vmatprep.subr.mxu0 0.0
  %612 = vmatpush1.msra.mxu0 0.0
  %613 = vmatprep.subr.mxu0 0.0
  %614 = vmatpush1.msra.mxu0 0.0
  %615 = vmatprep.subr.mxu0 0.0
  %616 = vmatpush1.msra.mxu0 0.0
  %617 = vmatprep.subr.mxu0 0.0
  %618 = vmatpush1.msra.mxu0 0.0
  %619 = vmatprep.subr.mxu0 0.0
  %620 = vmatpush1.msra.mxu0 0.0
  %621 = vmatprep.subr.mxu0 0.0
  %622 = vmatpush1.msra.mxu0 0.0
  %623 = vmatprep.subr.mxu0 0.0
  %624 = vmatpush1.msra.mxu0 0.0
  %625 = vmatprep.subr.mxu0 0.0
  %626 = vmatpush1.msra.mxu0 0.0
  %627 = vmatprep.subr.mxu0 0.0
  %628 = vmatpush1.msra.mxu0 0.0
  %629 = vmatprep.subr.mxu0 0.0
  %630 = vmatpush1.msra.mxu0 0.0
  %631 = vmatprep.subr.mxu0 0.0
  %632 = vmatpush1.msra.mxu0 0.0
  %633 = vmatprep.subr.mxu0 0.0
  %634 = vmatpush1.msra.mxu0 0.0
  %635 = vmatprep.mubr.f32.mxu0 0.0
  %636 = vmatmul.mubr.f32.gmra.mrb[0].mxu0 %v569
  %v637 = vpop.f32.mrb[0].mxu0
  %v638 = vadd.f32 0.0, %v637
  %v639 = vpop.f32.mrb[0].mxu0
  %640 = vdwg.mxu0
  %v642 = vrot.slane %v638, 2
  %v644 = vadd.f32 %v245, %v642
  %v645 = vxor.u32 %v644, 2147483648
  %v646 = vmul.f32 %v645, 1.442695
  %v647 = vpow.pop %v646
  %v648 = vadd.f32 %v647, 1.0
  %v649 = vrcp.pop %v648
  %v650 = vmul.f32 1.0, %v649
  %v651 = vtanh.pop %v644
  %v653 = vrot.slane %v558, 6
  %v655 = vmul.f32 %v650, %v653
  %657 = vrot.lane.b32.xlu0 %v651, 64
  %v658 = vpop.permute.xlu0 %657
  %v660 = vmul.f32 %v650, %v658
  %662 = vrot.lane.b32.xlu0 %v660, 32
  %v663 = vpop.permute.xlu0 %662
  %v665 = vadd.f32 %v655, %v663
  %v666 = vtanh.pop %v665
  %668 = vrot.lane.b32.xlu0 %v666, 64
  %v669 = vpop.permute.xlu0 %668
  %v671 = vmul.f32 %v650, %v669
  %v673 = vrot.slane %v671, 6
  %674 = vrot.lane.b32.xlu0 %v673, 32
  %v675 = vpop.permute.xlu0 %674
  %v676 = vsel %vm253, %v675, 0
  %678 = vmatprep.subr.mxu0 0.0
  %679 = vmatpush1.msra.mxu0 %v160
  %680 = vmatprep.subr.mxu0 0.0
  %681 = vmatpush1.msra.mxu0 %v161
  %682 = vmatprep.subr.mxu0 0.0
  %683 = vmatpush1.msra.mxu0 %v162
  %684 = vmatprep.subr.mxu0 0.0
  %685 = vmatpush1.msra.mxu0 %v163
  %686 = vmatprep.subr.mxu0 0.0
  %687 = vmatpush1.msra.mxu0 0.0
  %688 = vmatprep.subr.mxu0 0.0
  %689 = vmatpush1.msra.mxu0 0.0
  %690 = vmatprep.subr.mxu0 0.0
  %691 = vmatpush1.msra.mxu0 0.0
  %692 = vmatprep.subr.mxu0 0.0
  %693 = vmatpush1.msra.mxu0 0.0
  %694 = vmatprep.subr.mxu0 0.0
  %695 = vmatpush1.msra.mxu0 0.0
  %696 = vmatprep.subr.mxu0 0.0
  %697 = vmatpush1.msra.mxu0 0.0
  %698 = vmatprep.subr.mxu0 0.0
  %699 = vmatpush1.msra.mxu0 0.0
  %700 = vmatprep.subr.mxu0 0.0
  %701 = vmatpush1.msra.mxu0 0.0
  %702 = vmatprep.subr.mxu0 0.0
  %703 = vmatpush1.msra.mxu0 0.0
  %704 = vmatprep.subr.mxu0 0.0
  %705 = vmatpush1.msra.mxu0 0.0
  %706 = vmatprep.subr.mxu0 0.0
  %707 = vmatpush1.msra.mxu0 0.0
  %708 = vmatprep.subr.mxu0 0.0
  %709 = vmatpush1.msra.mxu0 0.0
  %710 = vmatprep.subr.mxu0 0.0
  %711 = vmatpush1.msra.mxu0 0.0
  %712 = vmatprep.subr.mxu0 0.0
  %713 = vmatpush1.msra.mxu0 0.0
  %714 = vmatprep.subr.mxu0 0.0
  %715 = vmatpush1.msra.mxu0 0.0
  %716 = vmatprep.subr.mxu0 0.0
  %717 = vmatpush1.msra.mxu0 0.0
  %718 = vmatprep.subr.mxu0 0.0
  %719 = vmatpush1.msra.mxu0 0.0
  %720 = vmatprep.subr.mxu0 0.0
  %721 = vmatpush1.msra.mxu0 0.0
  %722 = vmatprep.subr.mxu0 0.0
  %723 = vmatpush1.msra.mxu0 0.0
  %724 = vmatprep.subr.mxu0 0.0
  %725 = vmatpush1.msra.mxu0 0.0
  %726 = vmatprep.subr.mxu0 0.0
  %727 = vmatpush1.msra.mxu0 0.0
  %728 = vmatprep.subr.mxu0 0.0
  %729 = vmatpush1.msra.mxu0 0.0
  %730 = vmatprep.subr.mxu0 0.0
  %731 = vmatpush1.msra.mxu0 0.0
  %732 = vmatprep.subr.mxu0 0.0
  %733 = vmatpush1.msra.mxu0 0.0
  %734 = vmatprep.subr.mxu0 0.0
  %735 = vmatpush1.msra.mxu0 0.0
  %736 = vmatprep.subr.mxu0 0.0
  %737 = vmatpush1.msra.mxu0 0.0
  %738 = vmatprep.subr.mxu0 0.0
  %739 = vmatpush1.msra.mxu0 0.0
  %740 = vmatprep.subr.mxu0 0.0
  %741 = vmatpush1.msra.mxu0 0.0
  %742 = vmatprep.mubr.f32.mxu0 0.0
  %743 = vmatmul.mubr.f32.gmra.mrb[0].mxu0 %v676
  %v744 = vpop.f32.mrb[0].mxu0
  %v745 = vadd.f32 0.0, %v744
  %v746 = vpop.f32.mrb[0].mxu0
  %747 = vdwg.mxu0
  %v748 = vadd.f32 %v250, %v745
  %v749 = vxor.u32 %v748, 2147483648
  %v750 = vmul.f32 %v749, 1.442695
  %v751 = vpow.pop %v750
  %v752 = vadd.f32 %v751, 1.0
  %v753 = vrcp.pop %v752
  %v754 = vmul.f32 1.0, %v753
  %v755 = vtanh.pop %v748
  %v757 = vrot.slane %v665, 6
  %v759 = vmul.f32 %v754, %v757
  %761 = vrot.lane.b32.xlu0 %v755, 64
  %v762 = vpop.permute.xlu0 %761
  %v764 = vmul.f32 %v754, %v762
  %766 = vrot.lane.b32.xlu0 %v764, 32
  %v767 = vpop.permute.xlu0 %766
  %v769 = vadd.f32 %v759, %v767
  %v770 = vtanh.pop %v769
  %772 = vrot.lane.b32.xlu0 %v770, 64
  %v773 = vpop.permute.xlu0 %772
  %v775 = vmul.f32 %v754, %v773
  %777 = vrot.lane.b32.xlu0 %v775, 32
  %v778 = vpop.permute.xlu0 %777
  %v779 = vsel %vm253, %v778, 0
  %781 = vmatprep.subr.mxu0 0.0
  %782 = vmatpush1.msra.mxu0 %v160
  %783 = vmatprep.subr.mxu0 0.0
  %784 = vmatpush1.msra.mxu0 %v161
  %785 = vmatprep.subr.mxu0 0.0
  %786 = vmatpush1.msra.mxu0 %v162
  %787 = vmatprep.subr.mxu0 0.0
  %788 = vmatpush1.msra.mxu0 %v163
  %789 = vmatprep.subr.mxu0 0.0
  %790 = vmatpush1.msra.mxu0 0.0
  %791 = vmatprep.subr.mxu0 0.0
  %792 = vmatpush1.msra.mxu0 0.0
  %793 = vmatprep.subr.mxu0 0.0
  %794 = vmatpush1.msra.mxu0 0.0
  %795 = vmatprep.subr.mxu0 0.0
  %796 = vmatpush1.msra.mxu0 0.0
  %797 = vmatprep.subr.mxu0 0.0
  %798 = vmatpush1.msra.mxu0 0.0
  %799 = vmatprep.subr.mxu0 0.0
  %800 = vmatpush1.msra.mxu0 0.0
  %801 = vmatprep.subr.mxu0 0.0
  %802 = vmatpush1.msra.mxu0 0.0
  %803 = vmatprep.subr.mxu0 0.0
  %804 = vmatpush1.msra.mxu0 0.0
  %805 = vmatprep.subr.mxu0 0.0
  %806 = vmatpush1.msra.mxu0 0.0
  %807 = vmatprep.subr.mxu0 0.0
  %808 = vmatpush1.msra.mxu0 0.0
  %809 = vmatprep.subr.mxu0 0.0
  %810 = vmatpush1.msra.mxu0 0.0
  %811 = vmatprep.subr.mxu0 0.0
  %812 = vmatpush1.msra.mxu0 0.0
  %813 = vmatprep.subr.mxu0 0.0
  %814 = vmatpush1.msra.mxu0 0.0
  %815 = vmatprep.subr.mxu0 0.0
  %816 = vmatpush1.msra.mxu0 0.0
  %817 = vmatprep.subr.mxu0 0.0
  %818 = vmatpush1.msra.mxu0 0.0
  %819 = vmatprep.subr.mxu0 0.0
  %820 = vmatpush1.msra.mxu0 0.0
  %821 = vmatprep.subr.mxu0 0.0
  %822 = vmatpush1.msra.mxu0 0.0
  %823 = vmatprep.subr.mxu0 0.0
  %824 = vmatpush1.msra.mxu0 0.0
  %825 = vmatprep.subr.mxu0 0.0
  %826 = vmatpush1.msra.mxu0 0.0
  %827 = vmatprep.subr.mxu0 0.0
  %828 = vmatpush1.msra.mxu0 0.0
  %829 = vmatprep.subr.mxu0 0.0
  %830 = vmatpush1.msra.mxu0 0.0
  %831 = vmatprep.subr.mxu0 0.0
  %832 = vmatpush1.msra.mxu0 0.0
  %833 = vmatprep.subr.mxu0 0.0
  %834 = vmatpush1.msra.mxu0 0.0
  %835 = vmatprep.subr.mxu0 0.0
  %836 = vmatpush1.msra.mxu0 0.0
  %837 = vmatprep.subr.mxu0 0.0
  %838 = vmatpush1.msra.mxu0 0.0
  %839 = vmatprep.subr.mxu0 0.0
  %840 = vmatpush1.msra.mxu0 0.0
  %841 = vmatprep.subr.mxu0 0.0
  %842 = vmatpush1.msra.mxu0 0.0
  %843 = vmatprep.subr.mxu0 0.0
  %844 = vmatpush1.msra.mxu0 0.0
  %845 = vmatprep.mubr.f32.mxu0 0.0
  %846 = vmatmul.mubr.f32.gmra.mrb[0].mxu0 %v779
  %v847 = vpop.f32.mrb[0].mxu0
  %v848 = vadd.f32 0.0, %v847
  %v849 = vpop.f32.mrb[0].mxu0
  %850 = vdwg.mxu0
  %v852 = vrot.slane %v848, 6
  %v854 = vadd.f32 %v250, %v852
  %v855 = vxor.u32 %v854, 2147483648
  %v856 = vmul.f32 %v855, 1.442695
  %v857 = vpow.pop %v856
  %v858 = vadd.f32 %v857, 1.0
  %v859 = vrcp.pop %v858
  %v860 = vmul.f32 1.0, %v859
  %v861 = vtanh.pop %v854
  %v863 = vrot.slane %v769, 6
  %v865 = vmul.f32 %v860, %v863
  %867 = vrot.lane.b32.xlu0 %v861, 64
  %v868 = vpop.permute.xlu0 %867
  %v870 = vmul.f32 %v860, %v868
  %872 = vrot.lane.b32.xlu0 %v870, 32
  %v873 = vpop.permute.xlu0 %872
  %v875 = vadd.f32 %v865, %v873
  %v876 = vtanh.pop %v875
  %878 = vrot.lane.b32.xlu0 %v876, 64
  %v879 = vpop.permute.xlu0 %878
  %v881 = vmul.f32 %v860, %v879
  %v883 = vrot.slane %v881, 2
  %884 = vrot.lane.b32.xlu0 %v883, 32
  %v885 = vpop.permute.xlu0 %884
  %v886 = vsel %vm253, %v885, 0
  %888 = vmatprep.subr.mxu0 0.0
  %889 = vmatpush1.msra.mxu0 %v160
  %890 = vmatprep.subr.mxu0 0.0
  %891 = vmatpush1.msra.mxu0 %v161
  %892 = vmatprep.subr.mxu0 0.0
  %893 = vmatpush1.msra.mxu0 %v162
  %894 = vmatprep.subr.mxu0 0.0
  %895 = vmatpush1.msra.mxu0 %v163
  %896 = vmatprep.subr.mxu0 0.0
  %897 = vmatpush1.msra.mxu0 0.0
  %898 = vmatprep.subr.mxu0 0.0
  %899 = vmatpush1.msra.mxu0 0.0
  %900 = vmatprep.subr.mxu0 0.0
  %901 = vmatpush1.msra.mxu0 0.0
  %902 = vmatprep.subr.mxu0 0.0
  %903 = vmatpush1.msra.mxu0 0.0
  %904 = vmatprep.subr.mxu0 0.0
  %905 = vmatpush1.msra.mxu0 0.0
  %906 = vmatprep.subr.mxu0 0.0
  %907 = vmatpush1.msra.mxu0 0.0
  %908 = vmatprep.subr.mxu0 0.0
  %909 = vmatpush1.msra.mxu0 0.0
  %910 = vmatprep.subr.mxu0 0.0
  %911 = vmatpush1.msra.mxu0 0.0
  %912 = vmatprep.subr.mxu0 0.0
  %913 = vmatpush1.msra.mxu0 0.0
  %914 = vmatprep.subr.mxu0 0.0
  %915 = vmatpush1.msra.mxu0 0.0
  %916 = vmatprep.subr.mxu0 0.0
  %917 = vmatpush1.msra.mxu0 0.0
  %918 = vmatprep.subr.mxu0 0.0
  %919 = vmatpush1.msra.mxu0 0.0
  %920 = vmatprep.subr.mxu0 0.0
  %921 = vmatpush1.msra.mxu0 0.0
  %922 = vmatprep.subr.mxu0 0.0
  %923 = vmatpush1.msra.mxu0 0.0
  %924 = vmatprep.subr.mxu0 0.0
  %925 = vmatpush1.msra.mxu0 0.0
  %926 = vmatprep.subr.mxu0 0.0
  %927 = vmatpush1.msra.mxu0 0.0
  %928 = vmatprep.subr.mxu0 0.0
  %929 = vmatpush1.msra.mxu0 0.0
  %930 = vmatprep.subr.mxu0 0.0
  %931 = vmatpush1.msra.mxu0 0.0
  %932 = vmatprep.subr.mxu0 0.0
  %933 = vmatpush1.msra.mxu0 0.0
  %934 = vmatprep.subr.mxu0 0.0
  %935 = vmatpush1.msra.mxu0 0.0
  %936 = vmatprep.subr.mxu0 0.0
  %937 = vmatpush1.msra.mxu0 0.0
  %938 = vmatprep.subr.mxu0 0.0
  %939 = vmatpush1.msra.mxu0 0.0
  %940 = vmatprep.subr.mxu0 0.0
  %941 = vmatpush1.msra.mxu0 0.0
  %942 = vmatprep.subr.mxu0 0.0
  %943 = vmatpush1.msra.mxu0 0.0
  %944 = vmatprep.subr.mxu0 0.0
  %945 = vmatpush1.msra.mxu0 0.0
  %946 = vmatprep.subr.mxu0 0.0
  %947 = vmatpush1.msra.mxu0 0.0
  %948 = vmatprep.subr.mxu0 0.0
  %949 = vmatpush1.msra.mxu0 0.0
  %950 = vmatprep.subr.mxu0 0.0
  %951 = vmatpush1.msra.mxu0 0.0
  %952 = vmatprep.mubr.f32.mxu0 0.0
  %953 = vmatmul.mubr.f32.gmra.mrb[0].mxu0 %v886
  %v954 = vpop.f32.mrb[0].mxu0
  %v955 = vadd.f32 0.0, %v954
  %v956 = vpop.f32.mrb[0].mxu0
  %957 = vdwg.mxu0
  %v959 = vrot.slane %v955, 4
  %v961 = vadd.f32 %v250, %v959
  %v962 = vxor.u32 %v961, 2147483648
  %v963 = vmul.f32 %v962, 1.442695
  %v964 = vpow.pop %v963
  %v965 = vadd.f32 %v964, 1.0
  %v966 = vrcp.pop %v965
  %v967 = vmul.f32 1.0, %v966
  %v968 = vtanh.pop %v961
  %v970 = vrot.slane %v875, 6
  %v972 = vmul.f32 %v967, %v970
  %974 = vrot.lane.b32.xlu0 %v968, 64
  %v975 = vpop.permute.xlu0 %974
  %v977 = vmul.f32 %v967, %v975
  %979 = vrot.lane.b32.xlu0 %v977, 32
  %v980 = vpop.permute.xlu0 %979
  %v982 = vadd.f32 %v972, %v980
  %v983 = vtanh.pop %v982
  %985 = vrot.lane.b32.xlu0 %v983, 64
  %v986 = vpop.permute.xlu0 %985
  %v988 = vmul.f32 %v967, %v986
  %v990 = vrot.slane %v988, 4
  %991 = vrot.lane.b32.xlu0 %v990, 32
  %v992 = vpop.permute.xlu0 %991
  %v993 = vsel %vm253, %v992, 0
  %995 = vmatprep.subr.mxu0 0.0
  %996 = vmatpush1.msra.mxu0 %v160
  %997 = vmatprep.subr.mxu0 0.0
  %998 = vmatpush1.msra.mxu0 %v161
  %999 = vmatprep.subr.mxu0 0.0
  %1000 = vmatpush1.msra.mxu0 %v162
  %1001 = vmatprep.subr.mxu0 0.0
  %1002 = vmatpush1.msra.mxu0 %v163
  %1003 = vmatprep.subr.mxu0 0.0
  %1004 = vmatpush1.msra.mxu0 0.0
  %1005 = vmatprep.subr.mxu0 0.0
  %1006 = vmatpush1.msra.mxu0 0.0
  %1007 = vmatprep.subr.mxu0 0.0
  %1008 = vmatpush1.msra.mxu0 0.0
  %1009 = vmatprep.subr.mxu0 0.0
  %1010 = vmatpush1.msra.mxu0 0.0
  %1011 = vmatprep.subr.mxu0 0.0
  %1012 = vmatpush1.msra.mxu0 0.0
  %1013 = vmatprep.subr.mxu0 0.0
  %1014 = vmatpush1.msra.mxu0 0.0
  %1015 = vmatprep.subr.mxu0 0.0
  %1016 = vmatpush1.msra.mxu0 0.0
  %1017 = vmatprep.subr.mxu0 0.0
  %1018 = vmatpush1.msra.mxu0 0.0
  %1019 = vmatprep.subr.mxu0 0.0
  %1020 = vmatpush1.msra.mxu0 0.0
  %1021 = vmatprep.subr.mxu0 0.0
  %1022 = vmatpush1.msra.mxu0 0.0
  %1023 = vmatprep.subr.mxu0 0.0
  %1024 = vmatpush1.msra.mxu0 0.0
  %1025 = vmatprep.subr.mxu0 0.0
  %1026 = vmatpush1.msra.mxu0 0.0
  %1027 = vmatprep.subr.mxu0 0.0
  %1028 = vmatpush1.msra.mxu0 0.0
  %1029 = vmatprep.subr.mxu0 0.0
  %1030 = vmatpush1.msra.mxu0 0.0
  %1031 = vmatprep.subr.mxu0 0.0
  %1032 = vmatpush1.msra.mxu0 0.0
  %1033 = vmatprep.subr.mxu0 0.0
  %1034 = vmatpush1.msra.mxu0 0.0
  %1035 = vmatprep.subr.mxu0 0.0
  %1036 = vmatpush1.msra.mxu0 0.0
  %1037 = vmatprep.subr.mxu0 0.0
  %1038 = vmatpush1.msra.mxu0 0.0
  %1039 = vmatprep.subr.mxu0 0.0
  %1040 = vmatpush1.msra.mxu0 0.0
  %1041 = vmatprep.subr.mxu0 0.0
  %1042 = vmatpush1.msra.mxu0 0.0
  %1043 = vmatprep.subr.mxu0 0.0
  %1044 = vmatpush1.msra.mxu0 0.0
  %1045 = vmatprep.subr.mxu0 0.0
  %1046 = vmatpush1.msra.mxu0 0.0
  %1047 = vmatprep.subr.mxu0 0.0
  %1048 = vmatpush1.msra.mxu0 0.0
  %1049 = vmatprep.subr.mxu0 0.0
  %1050 = vmatpush1.msra.mxu0 0.0
  %1051 = vmatprep.subr.mxu0 0.0
  %1052 = vmatpush1.msra.mxu0 0.0
  %1053 = vmatprep.subr.mxu0 0.0
  %1054 = vmatpush1.msra.mxu0 0.0
  %1055 = vmatprep.subr.mxu0 0.0
  %1056 = vmatpush1.msra.mxu0 0.0
  %1057 = vmatprep.subr.mxu0 0.0
  %1058 = vmatpush1.msra.mxu0 0.0
  %1059 = vmatprep.mubr.f32.mxu0 0.0
  %1060 = vmatmul.mubr.f32.gmra.mrb[0].mxu0 %v993
  %v1061 = vpop.f32.mrb[0].mxu0
  %v1062 = vadd.f32 0.0, %v1061
  %v1063 = vpop.f32.mrb[0].mxu0
  %1064 = vdwg.mxu0
  %v1066 = vrot.slane %v1062, 2
  %v1068 = vadd.f32 %v250, %v1066
  %v1069 = vxor.u32 %v1068, 2147483648
  %v1070 = vmul.f32 %v1069, 1.442695
  %v1071 = vpow.pop %v1070
  %v1072 = vadd.f32 %v1071, 1.0
  %v1073 = vrcp.pop %v1072
  %v1074 = vmul.f32 1.0, %v1073
  %v1075 = vtanh.pop %v1068
  %v1077 = vrot.slane %v982, 6
  %v1079 = vmul.f32 %v1074, %v1077
  %1081 = vrot.lane.b32.xlu0 %v1075, 64
  %v1082 = vpop.permute.xlu0 %1081
  %v1084 = vmul.f32 %v1074, %v1082
  %1086 = vrot.lane.b32.xlu0 %v1084, 32
  %v1087 = vpop.permute.xlu0 %1086
  %v1089 = vadd.f32 %v1079, %v1087
  %v1090 = vtanh.pop %v1089
  %1092 = vrot.lane.b32.xlu0 %v1090, 64
  %v1093 = vpop.permute.xlu0 %1092
  %v1095 = vmul.f32 %v1074, %v1093
  %vm1096 = vcmask 1041408
  %v1097 = vsel %vm1096, %v351, %v457
  %vm1098 = vcmask 1043456
  %v1099 = vsel %vm1098, %v1097, %v564
  %vm1100 = vcmask 1045504
  %v1101 = vsel %vm1100, %v1099, %v671
  %v1102 = vsel %vm1096, %v775, %v881
  %v1103 = vsel %vm1098, %v1102, %v988
  %v1104 = vsel %vm1100, %v1103, %v1095
  %v1105 = vld [vmem:[%s7] sm:$0xff]
  %v1106 = vld [vmem:[%s7 + $0x8] sm:$0xff]
  %v1107 = vld [vmem:[%s7 + $0x10] sm:$0xff]
  %v1108 = vld [vmem:[%s7 + $0x18] sm:$0xff]
  %v1109 = vld [vmem:[%s8] sm:$0xff]
  %v1110 = vld [vmem:[%s8 + $0x8] sm:$0xff]
  %v1111 = vld [vmem:[%s8 + $0x10] sm:$0xff]
  %v1112 = vld [vmem:[%s8 + $0x18] sm:$0xff]
  %v1113 = vld [vmem:[%s9] sm:$0x1]
  %v1115 = vlaneseq
  %v1116 = vshrl.u32 %v1115, 7
  %v1117 = vsub.s32 0, %v1116
  %v1118 = vrot.slane %v1113, %v1117
  %1122 = vrot.lane.b32.xlu0 %v1101, 32
  %v1123 = vpop.permute.xlu0 %1122
  %1124 = vrot.lane.b32.xlu0 %v1104, 32
  %v1125 = vpop.permute.xlu0 %1124
  %v1126 = vsel %vm253, %v1123, 0
  %v1128 = vsel %vm253, %v1125, 0
  %1130 = vmatprep.subr.mxu0 0.0
  %1131 = vmatpush1.msra.mxu0 %v1105
  %1132 = vmatprep.subr.mxu0 0.0
  %1133 = vmatpush1.msra.mxu0 %v1106
  %1134 = vmatprep.subr.mxu0 0.0
  %1135 = vmatpush1.msra.mxu0 %v1107
  %1136 = vmatprep.subr.mxu0 0.0
  %1137 = vmatpush1.msra.mxu0 %v1108
  %1138 = vmatprep.subr.mxu0 0.0
  %1139 = vmatpush1.msra.mxu0 0.0
  %1140 = vmatprep.subr.mxu0 0.0
  %1141 = vmatpush1.msra.mxu0 0.0
  %1142 = vmatprep.subr.mxu0 0.0
  %1143 = vmatpush1.msra.mxu0 0.0
  %1144 = vmatprep.subr.mxu0 0.0
  %1145 = vmatpush1.msra.mxu0 0.0
  %1146 = vmatprep.subr.mxu0 0.0
  %1147 = vmatpush1.msra.mxu0 0.0
  %1148 = vmatprep.subr.mxu0 0.0
  %1149 = vmatpush1.msra.mxu0 0.0
  %1150 = vmatprep.subr.mxu0 0.0
  %1151 = vmatpush1.msra.mxu0 0.0
  %1152 = vmatprep.subr.mxu0 0.0
  %1153 = vmatpush1.msra.mxu0 0.0
  %1154 = vmatprep.subr.mxu0 0.0
  %1155 = vmatpush1.msra.mxu0 0.0
  %1156 = vmatprep.subr.mxu0 0.0
  %1157 = vmatpush1.msra.mxu0 0.0
  %1158 = vmatprep.subr.mxu0 0.0
  %1159 = vmatpush1.msra.mxu0 0.0
  %1160 = vmatprep.subr.mxu0 0.0
  %1161 = vmatpush1.msra.mxu0 0.0
  %1162 = vmatprep.subr.mxu0 0.0
  %1163 = vmatpush1.msra.mxu0 0.0
  %1164 = vmatprep.subr.mxu0 0.0
  %1165 = vmatpush1.msra.mxu0 0.0
  %1166 = vmatprep.subr.mxu0 0.0
  %1167 = vmatpush1.msra.mxu0 0.0
  %1168 = vmatprep.subr.mxu0 0.0
  %1169 = vmatpush1.msra.mxu0 0.0
  %1170 = vmatprep.subr.mxu0 0.0
  %1171 = vmatpush1.msra.mxu0 0.0
  %1172 = vmatprep.subr.mxu0 0.0
  %1173 = vmatpush1.msra.mxu0 0.0
  %1174 = vmatprep.subr.mxu0 0.0
  %1175 = vmatpush1.msra.mxu0 0.0
  %1176 = vmatprep.subr.mxu0 0.0
  %1177 = vmatpush1.msra.mxu0 0.0
  %1178 = vmatprep.subr.mxu0 0.0
  %1179 = vmatpush1.msra.mxu0 0.0
  %1180 = vmatprep.subr.mxu0 0.0
  %1181 = vmatpush1.msra.mxu0 0.0
  %1182 = vmatprep.subr.mxu0 0.0
  %1183 = vmatpush1.msra.mxu0 0.0
  %1184 = vmatprep.subr.mxu0 0.0
  %1185 = vmatpush1.msra.mxu0 0.0
  %1186 = vmatprep.subr.mxu0 0.0
  %1187 = vmatpush1.msra.mxu0 0.0
  %1188 = vmatprep.subr.mxu0 0.0
  %1189 = vmatpush1.msra.mxu0 0.0
  %1190 = vmatprep.subr.mxu0 0.0
  %1191 = vmatpush1.msra.mxu0 0.0
  %1192 = vmatprep.subr.mxu0 0.0
  %1193 = vmatpush1.msra.mxu0 0.0
  %1194 = vmatprep.mubr.f32.mxu0 0.0
  %1195 = vmatmul.mubr.f32.gmra.mrb[0].mxu0 %v1126
  %v1196 = vpop.f32.mrb[0].mxu0
  %v1197 = vadd.f32 %v1118, %v1196
  %v1198 = vpop.f32.mrb[0].mxu0
  %1199 = vmatprep.mubr.f32.mxu0 0.0
  %1200 = vmatmul.mubr.f32.gmra.mrb[0].mxu0 %v1128
  %v1201 = vpop.f32.mrb[0].mxu0
  %v1202 = vadd.f32 %v1118, %v1201
  %v1203 = vpop.f32.mrb[0].mxu0
  %1204 = vdwg.mxu0
  %1205 = vmatprep.subr.mxu0 0.0
  %1206 = vmatpush1.msra.mxu0 %v1109
  %1207 = vmatprep.subr.mxu0 0.0
  %1208 = vmatpush1.msra.mxu0 %v1110
  %1209 = vmatprep.subr.mxu0 0.0
  %1210 = vmatpush1.msra.mxu0 %v1111
  %1211 = vmatprep.subr.mxu0 0.0
  %1212 = vmatpush1.msra.mxu0 %v1112
  %1213 = vmatprep.subr.mxu0 0.0
  %1214 = vmatpush1.msra.mxu0 0.0
  %1215 = vmatprep.subr.mxu0 0.0
  %1216 = vmatpush1.msra.mxu0 0.0
  %1217 = vmatprep.subr.mxu0 0.0
  %1218 = vmatpush1.msra.mxu0 0.0
  %1219 = vmatprep.subr.mxu0 0.0
  %1220 = vmatpush1.msra.mxu0 0.0
  %1221 = vmatprep.subr.mxu0 0.0
  %1222 = vmatpush1.msra.mxu0 0.0
  %1223 = vmatprep.subr.mxu0 0.0
  %1224 = vmatpush1.msra.mxu0 0.0
  %1225 = vmatprep.subr.mxu0 0.0
  %1226 = vmatpush1.msra.mxu0 0.0
  %1227 = vmatprep.subr.mxu0 0.0
  %1228 = vmatpush1.msra.mxu0 0.0
  %1229 = vmatprep.subr.mxu0 0.0
  %1230 = vmatpush1.msra.mxu0 0.0
  %1231 = vmatprep.subr.mxu0 0.0
  %1232 = vmatpush1.msra.mxu0 0.0
  %1233 = vmatprep.subr.mxu0 0.0
  %1234 = vmatpush1.msra.mxu0 0.0
  %1235 = vmatprep.subr.mxu0 0.0
  %1236 = vmatpush1.msra.mxu0 0.0
  %1237 = vmatprep.subr.mxu0 0.0
  %1238 = vmatpush1.msra.mxu0 0.0
  %1239 = vmatprep.subr.mxu0 0.0
  %1240 = vmatpush1.msra.mxu0 0.0
  %1241 = vmatprep.subr.mxu0 0.0
  %1242 = vmatpush1.msra.mxu0 0.0
  %1243 = vmatprep.subr.mxu0 0.0
  %1244 = vmatpush1.msra.mxu0 0.0
  %1245 = vmatprep.subr.mxu0 0.0
  %1246 = vmatpush1.msra.mxu0 0.0
  %1247 = vmatprep.subr.mxu0 0.0
  %1248 = vmatpush1.msra.mxu0 0.0
  %1249 = vmatprep.subr.mxu0 0.0
  %1250 = vmatpush1.msra.mxu0 0.0
  %1251 = vmatprep.subr.mxu0 0.0
  %1252 = vmatpush1.msra.mxu0 0.0
  %1253 = vmatprep.subr.mxu0 0.0
  %1254 = vmatpush1.msra.mxu0 0.0
  %1255 = vmatprep.subr.mxu0 0.0
  %1256 = vmatpush1.msra.mxu0 0.0
  %1257 = vmatprep.subr.mxu0 0.0
  %1258 = vmatpush1.msra.mxu0 0.0
  %1259 = vmatprep.subr.mxu0 0.0
  %1260 = vmatpush1.msra.mxu0 0.0
  %1261 = vmatprep.subr.mxu0 0.0
  %1262 = vmatpush1.msra.mxu0 0.0
  %1263 = vmatprep.subr.mxu0 0.0
  %1264 = vmatpush1.msra.mxu0 0.0
  %1265 = vmatprep.subr.mxu0 0.0
  %1266 = vmatpush1.msra.mxu0 0.0
  %1267 = vmatprep.subr.mxu0 0.0
  %1268 = vmatpush1.msra.mxu0 0.0
  %1269 = vmatprep.mubr.f32.mxu0 0.0
  %1270 = vmatmul.mubr.f32.gmra.mrb[0].mxu0 %v255
  %v1271 = vpop.f32.mrb[0].mxu0
  %v1272 = vadd.f32 0.0, %v1271
  %v1273 = vpop.f32.mrb[0].mxu0
  %1274 = vdwg.mxu0
  %v1275 = vadd.f32 %v1197, %v1272
  %v1276 = vxor.u32 %v1275, 2147483648
  %v1277 = vmul.f32 %v1276, 1.442695
  %v1278 = vpow.pop %v1277
  %v1279 = vadd.f32 %v1278, 1.0
  %v1280 = vrcp.pop %v1279
  %v1281 = vmul.f32 1.0, %v1280
  %v1282 = vtanh.pop %v1275
  %v1283 = vmul.f32 %v1281, 0.0
  %1285 = vrot.lane.b32.xlu0 %v1282, 64
  %v1286 = vpop.permute.xlu0 %1285
  %v1288 = vmul.f32 %v1281, %v1286
  %1290 = vrot.lane.b32.xlu0 %v1288, 32
  %v1291 = vpop.permute.xlu0 %1290
  %v1293 = vadd.f32 %v1283, %v1291
  %v1294 = vtanh.pop %v1293
  %1296 = vrot.lane.b32.xlu0 %v1294, 64
  %v1297 = vpop.permute.xlu0 %1296
  %v1299 = vmul.f32 %v1281, %v1297
  %1301 = vrot.lane.b32.xlu0 %v1299, 32
  %v1302 = vpop.permute.xlu0 %1301
  %v1303 = vsel %vm253, %v1302, 0
  %1305 = vmatprep.subr.mxu0 0.0
  %1306 = vmatpush1.msra.mxu0 %v1109
  %1307 = vmatprep.subr.mxu0 0.0
  %1308 = vmatpush1.msra.mxu0 %v1110
  %1309 = vmatprep.subr.mxu0 0.0
  %1310 = vmatpush1.msra.mxu0 %v1111
  %1311 = vmatprep.subr.mxu0 0.0
  %1312 = vmatpush1.msra.mxu0 %v1112
  %1313 = vmatprep.subr.mxu0 0.0
  %1314 = vmatpush1.msra.mxu0 0.0
  %1315 = vmatprep.subr.mxu0 0.0
  %1316 = vmatpush1.msra.mxu0 0.0
  %1317 = vmatprep.subr.mxu0 0.0
  %1318 = vmatpush1.msra.mxu0 0.0
  %1319 = vmatprep.subr.mxu0 0.0
  %1320 = vmatpush1.msra.mxu0 0.0
  %1321 = vmatprep.subr.mxu0 0.0
  %1322 = vmatpush1.msra.mxu0 0.0
  %1323 = vmatprep.subr.mxu0 0.0
  %1324 = vmatpush1.msra.mxu0 0.0
  %1325 = vmatprep.subr.mxu0 0.0
  %1326 = vmatpush1.msra.mxu0 0.0
  %1327 = vmatprep.subr.mxu0 0.0
  %1328 = vmatpush1.msra.mxu0 0.0
  %1329 = vmatprep.subr.mxu0 0.0
  %1330 = vmatpush1.msra.mxu0 0.0
  %1331 = vmatprep.subr.mxu0 0.0
  %1332 = vmatpush1.msra.mxu0 0.0
  %1333 = vmatprep.subr.mxu0 0.0
  %1334 = vmatpush1.msra.mxu0 0.0
  %1335 = vmatprep.subr.mxu0 0.0
  %1336 = vmatpush1.msra.mxu0 0.0
  %1337 = vmatprep.subr.mxu0 0.0
  %1338 = vmatpush1.msra.mxu0 0.0
  %1339 = vmatprep.subr.mxu0 0.0
  %1340 = vmatpush1.msra.mxu0 0.0
  %1341 = vmatprep.subr.mxu0 0.0
  %1342 = vmatpush1.msra.mxu0 0.0
  %1343 = vmatprep.subr.mxu0 0.0
  %1344 = vmatpush1.msra.mxu0 0.0
  %1345 = vmatprep.subr.mxu0 0.0
  %1346 = vmatpush1.msra.mxu0 0.0
  %1347 = vmatprep.subr.mxu0 0.0
  %1348 = vmatpush1.msra.mxu0 0.0
  %1349 = vmatprep.subr.mxu0 0.0
  %1350 = vmatpush1.msra.mxu0 0.0
  %1351 = vmatprep.subr.mxu0 0.0
  %1352 = vmatpush1.msra.mxu0 0.0
  %1353 = vmatprep.subr.mxu0 0.0
  %1354 = vmatpush1.msra.mxu0 0.0
  %1355 = vmatprep.subr.mxu0 0.0
  %1356 = vmatpush1.msra.mxu0 0.0
  %1357 = vmatprep.subr.mxu0 0.0
  %1358 = vmatpush1.msra.mxu0 0.0
  %1359 = vmatprep.subr.mxu0 0.0
  %1360 = vmatpush1.msra.mxu0 0.0
  %1361 = vmatprep.subr.mxu0 0.0
  %1362 = vmatpush1.msra.mxu0 0.0
  %1363 = vmatprep.subr.mxu0 0.0
  %1364 = vmatpush1.msra.mxu0 0.0
  %1365 = vmatprep.subr.mxu0 0.0
  %1366 = vmatpush1.msra.mxu0 0.0
  %1367 = vmatprep.subr.mxu0 0.0
  %1368 = vmatpush1.msra.mxu0 0.0
  %1369 = vmatprep.mubr.f32.mxu0 0.0
  %1370 = vmatmul.mubr.f32.gmra.mrb[0].mxu0 %v1303
  %v1371 = vpop.f32.mrb[0].mxu0
  %v1372 = vadd.f32 0.0, %v1371
  %v1373 = vpop.f32.mrb[0].mxu0
  %1374 = vdwg.mxu0
  %v1376 = vrot.slane %v1372, 6
  %v1378 = vadd.f32 %v1197, %v1376
  %v1379 = vxor.u32 %v1378, 2147483648
  %v1380 = vmul.f32 %v1379, 1.442695
  %v1381 = vpow.pop %v1380
  %v1382 = vadd.f32 %v1381, 1.0
  %v1383 = vrcp.pop %v1382
  %v1384 = vmul.f32 1.0, %v1383
  %v1385 = vtanh.pop %v1378
  %v1387 = vrot.slane %v1293, 6
  %v1389 = vmul.f32 %v1384, %v1387
  %1391 = vrot.lane.b32.xlu0 %v1385, 64
  %v1392 = vpop.permute.xlu0 %1391
  %v1394 = vmul.f32 %v1384, %v1392
  %1396 = vrot.lane.b32.xlu0 %v1394, 32
  %v1397 = vpop.permute.xlu0 %1396
  %v1399 = vadd.f32 %v1389, %v1397
  %v1400 = vtanh.pop %v1399
  %1402 = vrot.lane.b32.xlu0 %v1400, 64
  %v1403 = vpop.permute.xlu0 %1402
  %v1405 = vmul.f32 %v1384, %v1403
  %v1407 = vrot.slane %v1405, 2
  %1408 = vrot.lane.b32.xlu0 %v1407, 32
  %v1409 = vpop.permute.xlu0 %1408
  %v1410 = vsel %vm253, %v1409, 0
  %1412 = vmatprep.subr.mxu0 0.0
  %1413 = vmatpush1.msra.mxu0 %v1109
  %1414 = vmatprep.subr.mxu0 0.0
  %1415 = vmatpush1.msra.mxu0 %v1110
  %1416 = vmatprep.subr.mxu0 0.0
  %1417 = vmatpush1.msra.mxu0 %v1111
  %1418 = vmatprep.subr.mxu0 0.0
  %1419 = vmatpush1.msra.mxu0 %v1112
  %1420 = vmatprep.subr.mxu0 0.0
  %1421 = vmatpush1.msra.mxu0 0.0
  %1422 = vmatprep.subr.mxu0 0.0
  %1423 = vmatpush1.msra.mxu0 0.0
  %1424 = vmatprep.subr.mxu0 0.0
  %1425 = vmatpush1.msra.mxu0 0.0
  %1426 = vmatprep.subr.mxu0 0.0
  %1427 = vmatpush1.msra.mxu0 0.0
  %1428 = vmatprep.subr.mxu0 0.0
  %1429 = vmatpush1.msra.mxu0 0.0
  %1430 = vmatprep.subr.mxu0 0.0
  %1431 = vmatpush1.msra.mxu0 0.0
  %1432 = vmatprep.subr.mxu0 0.0
  %1433 = vmatpush1.msra.mxu0 0.0
  %1434 = vmatprep.subr.mxu0 0.0
  %1435 = vmatpush1.msra.mxu0 0.0
  %1436 = vmatprep.subr.mxu0 0.0
  %1437 = vmatpush1.msra.mxu0 0.0
  %1438 = vmatprep.subr.mxu0 0.0
  %1439 = vmatpush1.msra.mxu0 0.0
  %1440 = vmatprep.subr.mxu0 0.0
  %1441 = vmatpush1.msra.mxu0 0.0
  %1442 = vmatprep.subr.mxu0 0.0
  %1443 = vmatpush1.msra.mxu0 0.0
  %1444 = vmatprep.subr.mxu0 0.0
  %1445 = vmatpush1.msra.mxu0 0.0
  %1446 = vmatprep.subr.mxu0 0.0
  %1447 = vmatpush1.msra.mxu0 0.0
  %1448 = vmatprep.subr.mxu0 0.0
  %1449 = vmatpush1.msra.mxu0 0.0
  %1450 = vmatprep.subr.mxu0 0.0
  %1451 = vmatpush1.msra.mxu0 0.0
  %1452 = vmatprep.subr.mxu0 0.0
  %1453 = vmatpush1.msra.mxu0 0.0
  %1454 = vmatprep.subr.mxu0 0.0
  %1455 = vmatpush1.msra.mxu0 0.0
  %1456 = vmatprep.subr.mxu0 0.0
  %1457 = vmatpush1.msra.mxu0 0.0
  %1458 = vmatprep.subr.mxu0 0.0
  %1459 = vmatpush1.msra.mxu0 0.0
  %1460 = vmatprep.subr.mxu0 0.0
  %1461 = vmatpush1.msra.mxu0 0.0
  %1462 = vmatprep.subr.mxu0 0.0
  %1463 = vmatpush1.msra.mxu0 0.0
  %1464 = vmatprep.subr.mxu0 0.0
  %1465 = vmatpush1.msra.mxu0 0.0
  %1466 = vmatprep.subr.mxu0 0.0
  %1467 = vmatpush1.msra.mxu0 0.0
  %1468 = vmatprep.subr.mxu0 0.0
  %1469 = vmatpush1.msra.mxu0 0.0
  %1470 = vmatprep.subr.mxu0 0.0
  %1471 = vmatpush1.msra.mxu0 0.0
  %1472 = vmatprep.subr.mxu0 0.0
  %1473 = vmatpush1.msra.mxu0 0.0
  %1474 = vmatprep.subr.mxu0 0.0
  %1475 = vmatpush1.msra.mxu0 0.0
  %1476 = vmatprep.mubr.f32.mxu0 0.0
  %1477 = vmatmul.mubr.f32.gmra.mrb[0].mxu0 %v1410
  %v1478 = vpop.f32.mrb[0].mxu0
  %v1479 = vadd.f32 0.0, %v1478
  %v1480 = vpop.f32.mrb[0].mxu0
  %1481 = vdwg.mxu0
  %v1483 = vrot.slane %v1479, 4
  %v1485 = vadd.f32 %v1197, %v1483
  %v1486 = vxor.u32 %v1485, 2147483648
  %v1487 = vmul.f32 %v1486, 1.442695
  %v1488 = vpow.pop %v1487
  %v1489 = vadd.f32 %v1488, 1.0
  %v1490 = vrcp.pop %v1489
  %v1491 = vmul.f32 1.0, %v1490
  %v1492 = vtanh.pop %v1485
  %v1494 = vrot.slane %v1399, 6
  %v1496 = vmul.f32 %v1491, %v1494
  %1498 = vrot.lane.b32.xlu0 %v1492, 64
  %v1499 = vpop.permute.xlu0 %1498
  %v1501 = vmul.f32 %v1491, %v1499
  %1503 = vrot.lane.b32.xlu0 %v1501, 32
  %v1504 = vpop.permute.xlu0 %1503
  %v1506 = vadd.f32 %v1496, %v1504
  %v1507 = vtanh.pop %v1506
  %1509 = vrot.lane.b32.xlu0 %v1507, 64
  %v1510 = vpop.permute.xlu0 %1509
  %v1512 = vmul.f32 %v1491, %v1510
  %v1514 = vrot.slane %v1512, 4
  %1515 = vrot.lane.b32.xlu0 %v1514, 32
  %v1516 = vpop.permute.xlu0 %1515
  %v1517 = vsel %vm253, %v1516, 0
  %1519 = vmatprep.subr.mxu0 0.0
  %1520 = vmatpush1.msra.mxu0 %v1109
  %1521 = vmatprep.subr.mxu0 0.0
  %1522 = vmatpush1.msra.mxu0 %v1110
  %1523 = vmatprep.subr.mxu0 0.0
  %1524 = vmatpush1.msra.mxu0 %v1111
  %1525 = vmatprep.subr.mxu0 0.0
  %1526 = vmatpush1.msra.mxu0 %v1112
  %1527 = vmatprep.subr.mxu0 0.0
  %1528 = vmatpush1.msra.mxu0 0.0
  %1529 = vmatprep.subr.mxu0 0.0
  %1530 = vmatpush1.msra.mxu0 0.0
  %1531 = vmatprep.subr.mxu0 0.0
  %1532 = vmatpush1.msra.mxu0 0.0
  %1533 = vmatprep.subr.mxu0 0.0
  %1534 = vmatpush1.msra.mxu0 0.0
  %1535 = vmatprep.subr.mxu0 0.0
  %1536 = vmatpush1.msra.mxu0 0.0
  %1537 = vmatprep.subr.mxu0 0.0
  %1538 = vmatpush1.msra.mxu0 0.0
  %1539 = vmatprep.subr.mxu0 0.0
  %1540 = vmatpush1.msra.mxu0 0.0
  %1541 = vmatprep.subr.mxu0 0.0
  %1542 = vmatpush1.msra.mxu0 0.0
  %1543 = vmatprep.subr.mxu0 0.0
  %1544 = vmatpush1.msra.mxu0 0.0
  %1545 = vmatprep.subr.mxu0 0.0
  %1546 = vmatpush1.msra.mxu0 0.0
  %1547 = vmatprep.subr.mxu0 0.0
  %1548 = vmatpush1.msra.mxu0 0.0
  %1549 = vmatprep.subr.mxu0 0.0
  %1550 = vmatpush1.msra.mxu0 0.0
  %1551 = vmatprep.subr.mxu0 0.0
  %1552 = vmatpush1.msra.mxu0 0.0
  %1553 = vmatprep.subr.mxu0 0.0
  %1554 = vmatpush1.msra.mxu0 0.0
  %1555 = vmatprep.subr.mxu0 0.0
  %1556 = vmatpush1.msra.mxu0 0.0
  %1557 = vmatprep.subr.mxu0 0.0
  %1558 = vmatpush1.msra.mxu0 0.0
  %1559 = vmatprep.subr.mxu0 0.0
  %1560 = vmatpush1.msra.mxu0 0.0
  %1561 = vmatprep.subr.mxu0 0.0
  %1562 = vmatpush1.msra.mxu0 0.0
  %1563 = vmatprep.subr.mxu0 0.0
  %1564 = vmatpush1.msra.mxu0 0.0
  %1565 = vmatprep.subr.mxu0 0.0
  %1566 = vmatpush1.msra.mxu0 0.0
  %1567 = vmatprep.subr.mxu0 0.0
  %1568 = vmatpush1.msra.mxu0 0.0
  %1569 = vmatprep.subr.mxu0 0.0
  %1570 = vmatpush1.msra.mxu0 0.0
  %1571 = vmatprep.subr.mxu0 0.0
  %1572 = vmatpush1.msra.mxu0 0.0
  %1573 = vmatprep.subr.mxu0 0.0
  %1574 = vmatpush1.msra.mxu0 0.0
  %1575 = vmatprep.subr.mxu0 0.0
  %1576 = vmatpush1.msra.mxu0 0.0
  %1577 = vmatprep.subr.mxu0 0.0
  %1578 = vmatpush1.msra.mxu0 0.0
  %1579 = vmatprep.subr.mxu0 0.0
  %1580 = vmatpush1.msra.mxu0 0.0
  %1581 = vmatprep.subr.mxu0 0.0
  %1582 = vmatpush1.msra.mxu0 0.0
  %1583 = vmatprep.mubr.f32.mxu0 0.0
  %1584 = vmatmul.mubr.f32.gmra.mrb[0].mxu0 %v1517
  %v1585 = vpop.f32.mrb[0].mxu0
  %v1586 = vadd.f32 0.0, %v1585
  %v1587 = vpop.f32.mrb[0].mxu0
  %1588 = vdwg.mxu0
  %v1590 = vrot.slane %v1586, 2
  %v1592 = vadd.f32 %v1197, %v1590
  %v1593 = vxor.u32 %v1592, 2147483648
  %v1594 = vmul.f32 %v1593, 1.442695
  %v1595 = vpow.pop %v1594
  %v1596 = vadd.f32 %v1595, 1.0
  %v1597 = vrcp.pop %v1596
  %v1598 = vmul.f32 1.0, %v1597
  %v1599 = vtanh.pop %v1592
  %v1601 = vrot.slane %v1506, 6
  %v1603 = vmul.f32 %v1598, %v1601
  %1605 = vrot.lane.b32.xlu0 %v1599, 64
  %v1606 = vpop.permute.xlu0 %1605
  %v1608 = vmul.f32 %v1598, %v1606
  %1610 = vrot.lane.b32.xlu0 %v1608, 32
  %v1611 = vpop.permute.xlu0 %1610
  %v1613 = vadd.f32 %v1603, %v1611
  %v1614 = vtanh.pop %v1613
  %1616 = vrot.lane.b32.xlu0 %v1614, 64
  %v1617 = vpop.permute.xlu0 %1616
  %v1619 = vmul.f32 %v1598, %v1617
  %v1621 = vrot.slane %v1619, 6
  %1622 = vrot.lane.b32.xlu0 %v1621, 32
  %v1623 = vpop.permute.xlu0 %1622
  %v1624 = vsel %vm253, %v1623, 0
  %1626 = vmatprep.subr.mxu0 0.0
  %1627 = vmatpush1.msra.mxu0 %v1109
  %1628 = vmatprep.subr.mxu0 0.0
  %1629 = vmatpush1.msra.mxu0 %v1110
  %1630 = vmatprep.subr.mxu0 0.0
  %1631 = vmatpush1.msra.mxu0 %v1111
  %1632 = vmatprep.subr.mxu0 0.0
  %1633 = vmatpush1.msra.mxu0 %v1112
  %1634 = vmatprep.subr.mxu0 0.0
  %1635 = vmatpush1.msra.mxu0 0.0
  %1636 = vmatprep.subr.mxu0 0.0
  %1637 = vmatpush1.msra.mxu0 0.0
  %1638 = vmatprep.subr.mxu0 0.0
  %1639 = vmatpush1.msra.mxu0 0.0
  %1640 = vmatprep.subr.mxu0 0.0
  %1641 = vmatpush1.msra.mxu0 0.0
  %1642 = vmatprep.subr.mxu0 0.0
  %1643 = vmatpush1.msra.mxu0 0.0
  %1644 = vmatprep.subr.mxu0 0.0
  %1645 = vmatpush1.msra.mxu0 0.0
  %1646 = vmatprep.subr.mxu0 0.0
  %1647 = vmatpush1.msra.mxu0 0.0
  %1648 = vmatprep.subr.mxu0 0.0
  %1649 = vmatpush1.msra.mxu0 0.0
  %1650 = vmatprep.subr.mxu0 0.0
  %1651 = vmatpush1.msra.mxu0 0.0
  %1652 = vmatprep.subr.mxu0 0.0
  %1653 = vmatpush1.msra.mxu0 0.0
  %1654 = vmatprep.subr.mxu0 0.0
  %1655 = vmatpush1.msra.mxu0 0.0
  %1656 = vmatprep.subr.mxu0 0.0
  %1657 = vmatpush1.msra.mxu0 0.0
  %1658 = vmatprep.subr.mxu0 0.0
  %1659 = vmatpush1.msra.mxu0 0.0
  %1660 = vmatprep.subr.mxu0 0.0
  %1661 = vmatpush1.msra.mxu0 0.0
  %1662 = vmatprep.subr.mxu0 0.0
  %1663 = vmatpush1.msra.mxu0 0.0
  %1664 = vmatprep.subr.mxu0 0.0
  %1665 = vmatpush1.msra.mxu0 0.0
  %1666 = vmatprep.subr.mxu0 0.0
  %1667 = vmatpush1.msra.mxu0 0.0
  %1668 = vmatprep.subr.mxu0 0.0
  %1669 = vmatpush1.msra.mxu0 0.0
  %1670 = vmatprep.subr.mxu0 0.0
  %1671 = vmatpush1.msra.mxu0 0.0
  %1672 = vmatprep.subr.mxu0 0.0
  %1673 = vmatpush1.msra.mxu0 0.0
  %1674 = vmatprep.subr.mxu0 0.0
  %1675 = vmatpush1.msra.mxu0 0.0
  %1676 = vmatprep.subr.mxu0 0.0
  %1677 = vmatpush1.msra.mxu0 0.0
  %1678 = vmatprep.subr.mxu0 0.0
  %1679 = vmatpush1.msra.mxu0 0.0
  %1680 = vmatprep.subr.mxu0 0.0
  %1681 = vmatpush1.msra.mxu0 0.0
  %1682 = vmatprep.subr.mxu0 0.0
  %1683 = vmatpush1.msra.mxu0 0.0
  %1684 = vmatprep.subr.mxu0 0.0
  %1685 = vmatpush1.msra.mxu0 0.0
  %1686 = vmatprep.subr.mxu0 0.0
  %1687 = vmatpush1.msra.mxu0 0.0
  %1688 = vmatprep.subr.mxu0 0.0
  %1689 = vmatpush1.msra.mxu0 0.0
  %1690 = vmatprep.mubr.f32.mxu0 0.0
  %1691 = vmatmul.mubr.f32.gmra.mrb[0].mxu0 %v1624
  %v1692 = vpop.f32.mrb[0].mxu0
  %v1693 = vadd.f32 0.0, %v1692
  %v1694 = vpop.f32.mrb[0].mxu0
  %1695 = vdwg.mxu0
  %v1696 = vadd.f32 %v1202, %v1693
  %v1697 = vxor.u32 %v1696, 2147483648
  %v1698 = vmul.f32 %v1697, 1.442695
  %v1699 = vpow.pop %v1698
  %v1700 = vadd.f32 %v1699, 1.0
  %v1701 = vrcp.pop %v1700
  %v1702 = vmul.f32 1.0, %v1701
  %v1703 = vtanh.pop %v1696
  %v1705 = vrot.slane %v1613, 6
  %v1707 = vmul.f32 %v1702, %v1705
  %1709 = vrot.lane.b32.xlu0 %v1703, 64
  %v1710 = vpop.permute.xlu0 %1709
  %v1712 = vmul.f32 %v1702, %v1710
  %1714 = vrot.lane.b32.xlu0 %v1712, 32
  %v1715 = vpop.permute.xlu0 %1714
  %v1717 = vadd.f32 %v1707, %v1715
  %v1718 = vtanh.pop %v1717
  %1720 = vrot.lane.b32.xlu0 %v1718, 64
  %v1721 = vpop.permute.xlu0 %1720
  %v1723 = vmul.f32 %v1702, %v1721
  %1725 = vrot.lane.b32.xlu0 %v1723, 32
  %v1726 = vpop.permute.xlu0 %1725
  %v1727 = vsel %vm253, %v1726, 0
  %1729 = vmatprep.subr.mxu0 0.0
  %1730 = vmatpush1.msra.mxu0 %v1109
  %1731 = vmatprep.subr.mxu0 0.0
  %1732 = vmatpush1.msra.mxu0 %v1110
  %1733 = vmatprep.subr.mxu0 0.0
  %1734 = vmatpush1.msra.mxu0 %v1111
  %1735 = vmatprep.subr.mxu0 0.0
  %1736 = vmatpush1.msra.mxu0 %v1112
  %1737 = vmatprep.subr.mxu0 0.0
  %1738 = vmatpush1.msra.mxu0 0.0
  %1739 = vmatprep.subr.mxu0 0.0
  %1740 = vmatpush1.msra.mxu0 0.0
  %1741 = vmatprep.subr.mxu0 0.0
  %1742 = vmatpush1.msra.mxu0 0.0
  %1743 = vmatprep.subr.mxu0 0.0
  %1744 = vmatpush1.msra.mxu0 0.0
  %1745 = vmatprep.subr.mxu0 0.0
  %1746 = vmatpush1.msra.mxu0 0.0
  %1747 = vmatprep.subr.mxu0 0.0
  %1748 = vmatpush1.msra.mxu0 0.0
  %1749 = vmatprep.subr.mxu0 0.0
  %1750 = vmatpush1.msra.mxu0 0.0
  %1751 = vmatprep.subr.mxu0 0.0
  %1752 = vmatpush1.msra.mxu0 0.0
  %1753 = vmatprep.subr.mxu0 0.0
  %1754 = vmatpush1.msra.mxu0 0.0
  %1755 = vmatprep.subr.mxu0 0.0
  %1756 = vmatpush1.msra.mxu0 0.0
  %1757 = vmatprep.subr.mxu0 0.0
  %1758 = vmatpush1.msra.mxu0 0.0
  %1759 = vmatprep.subr.mxu0 0.0
  %1760 = vmatpush1.msra.mxu0 0.0
  %1761 = vmatprep.subr.mxu0 0.0
  %1762 = vmatpush1.msra.mxu0 0.0
  %1763 = vmatprep.subr.mxu0 0.0
  %1764 = vmatpush1.msra.mxu0 0.0
  %1765 = vmatprep.subr.mxu0 0.0
  %1766 = vmatpush1.msra.mxu0 0.0
  %1767 = vmatprep.subr.mxu0 0.0
  %1768 = vmatpush1.msra.mxu0 0.0
  %1769 = vmatprep.subr.mxu0 0.0
  %1770 = vmatpush1.msra.mxu0 0.0
  %1771 = vmatprep.subr.mxu0 0.0
  %1772 = vmatpush1.msra.mxu0 0.0
  %1773 = vmatprep.subr.mxu0 0.0
  %1774 = vmatpush1.msra.mxu0 0.0
  %1775 = vmatprep.subr.mxu0 0.0
  %1776 = vmatpush1.msra.mxu0 0.0
  %1777 = vmatprep.subr.mxu0 0.0
  %1778 = vmatpush1.msra.mxu0 0.0
  %1779 = vmatprep.subr.mxu0 0.0
  %1780 = vmatpush1.msra.mxu0 0.0
  %1781 = vmatprep.subr.mxu0 0.0
  %1782 = vmatpush1.msra.mxu0 0.0
  %1783 = vmatprep.subr.mxu0 0.0
  %1784 = vmatpush1.msra.mxu0 0.0
  %1785 = vmatprep.subr.mxu0 0.0
  %1786 = vmatpush1.msra.mxu0 0.0
  %1787 = vmatprep.subr.mxu0 0.0
  %1788 = vmatpush1.msra.mxu0 0.0
  %1789 = vmatprep.subr.mxu0 0.0
  %1790 = vmatpush1.msra.mxu0 0.0
  %1791 = vmatprep.subr.mxu0 0.0
  %1792 = vmatpush1.msra.mxu0 0.0
  %1793 = vmatprep.mubr.f32.mxu0 0.0
  %1794 = vmatmul.mubr.f32.gmra.mrb[0].mxu0 %v1727
  %v1795 = vpop.f32.mrb[0].mxu0
  %v1796 = vadd.f32 0.0, %v1795
  %v1797 = vpop.f32.mrb[0].mxu0
  %1798 = vdwg.mxu0
  %v1800 = vrot.slane %v1796, 6
  %v1802 = vadd.f32 %v1202, %v1800
  %v1803 = vxor.u32 %v1802, 2147483648
  %v1804 = vmul.f32 %v1803, 1.442695
  %v1805 = vpow.pop %v1804
  %v1806 = vadd.f32 %v1805, 1.0
  %v1807 = vrcp.pop %v1806
  %v1808 = vmul.f32 1.0, %v1807
  %v1809 = vtanh.pop %v1802
  %v1811 = vrot.slane %v1717, 6
  %v1813 = vmul.f32 %v1808, %v1811
  %1815 = vrot.lane.b32.xlu0 %v1809, 64
  %v1816 = vpop.permute.xlu0 %1815
  %v1818 = vmul.f32 %v1808, %v1816
  %1820 = vrot.lane.b32.xlu0 %v1818, 32
  %v1821 = vpop.permute.xlu0 %1820
  %v1823 = vadd.f32 %v1813, %v1821
  %v1824 = vtanh.pop %v1823
  %1826 = vrot.lane.b32.xlu0 %v1824, 64
  %v1827 = vpop.permute.xlu0 %1826
  %v1829 = vmul.f32 %v1808, %v1827
  %v1831 = vrot.slane %v1829, 2
  %1832 = vrot.lane.b32.xlu0 %v1831, 32
  %v1833 = vpop.permute.xlu0 %1832
  %v1834 = vsel %vm253, %v1833, 0
  %1836 = vmatprep.subr.mxu0 0.0
  %1837 = vmatpush1.msra.mxu0 %v1109
  %1838 = vmatprep.subr.mxu0 0.0
  %1839 = vmatpush1.msra.mxu0 %v1110
  %1840 = vmatprep.subr.mxu0 0.0
  %1841 = vmatpush1.msra.mxu0 %v1111
  %1842 = vmatprep.subr.mxu0 0.0
  %1843 = vmatpush1.msra.mxu0 %v1112
  %1844 = vmatprep.subr.mxu0 0.0
  %1845 = vmatpush1.msra.mxu0 0.0
  %1846 = vmatprep.subr.mxu0 0.0
  %1847 = vmatpush1.msra.mxu0 0.0
  %1848 = vmatprep.subr.mxu0 0.0
  %1849 = vmatpush1.msra.mxu0 0.0
  %1850 = vmatprep.subr.mxu0 0.0
  %1851 = vmatpush1.msra.mxu0 0.0
  %1852 = vmatprep.subr.mxu0 0.0
  %1853 = vmatpush1.msra.mxu0 0.0
  %1854 = vmatprep.subr.mxu0 0.0
  %1855 = vmatpush1.msra.mxu0 0.0
  %1856 = vmatprep.subr.mxu0 0.0
  %1857 = vmatpush1.msra.mxu0 0.0
  %1858 = vmatprep.subr.mxu0 0.0
  %1859 = vmatpush1.msra.mxu0 0.0
  %1860 = vmatprep.subr.mxu0 0.0
  %1861 = vmatpush1.msra.mxu0 0.0
  %1862 = vmatprep.subr.mxu0 0.0
  %1863 = vmatpush1.msra.mxu0 0.0
  %1864 = vmatprep.subr.mxu0 0.0
  %1865 = vmatpush1.msra.mxu0 0.0
  %1866 = vmatprep.subr.mxu0 0.0
  %1867 = vmatpush1.msra.mxu0 0.0
  %1868 = vmatprep.subr.mxu0 0.0
  %1869 = vmatpush1.msra.mxu0 0.0
  %1870 = vmatprep.subr.mxu0 0.0
  %1871 = vmatpush1.msra.mxu0 0.0
  %1872 = vmatprep.subr.mxu0 0.0
  %1873 = vmatpush1.msra.mxu0 0.0
  %1874 = vmatprep.subr.mxu0 0.0
  %1875 = vmatpush1.msra.mxu0 0.0
  %1876 = vmatprep.subr.mxu0 0.0
  %1877 = vmatpush1.msra.mxu0 0.0
  %1878 = vmatprep.subr.mxu0 0.0
  %1879 = vmatpush1.msra.mxu0 0.0
  %1880 = vmatprep.subr.mxu0 0.0
  %1881 = vmatpush1.msra.mxu0 0.0
  %1882 = vmatprep.subr.mxu0 0.0
  %1883 = vmatpush1.msra.mxu0 0.0
  %1884 = vmatprep.subr.mxu0 0.0
  %1885 = vmatpush1.msra.mxu0 0.0
  %1886 = vmatprep.subr.mxu0 0.0
  %1887 = vmatpush1.msra.mxu0 0.0
  %1888 = vmatprep.subr.mxu0 0.0
  %1889 = vmatpush1.msra.mxu0 0.0
  %1890 = vmatprep.subr.mxu0 0.0
  %1891 = vmatpush1.msra.mxu0 0.0
  %1892 = vmatprep.subr.mxu0 0.0
  %1893 = vmatpush1.msra.mxu0 0.0
  %1894 = vmatprep.subr.mxu0 0.0
  %1895 = vmatpush1.msra.mxu0 0.0
  %1896 = vmatprep.subr.mxu0 0.0
  %1897 = vmatpush1.msra.mxu0 0.0
  %1898 = vmatprep.subr.mxu0 0.0
  %1899 = vmatpush1.msra.mxu0 0.0
  %1900 = vmatprep.mubr.f32.mxu0 0.0
  %1901 = vmatmul.mubr.f32.gmra.mrb[0].mxu0 %v1834
  %v1902 = vpop.f32.mrb[0].mxu0
  %v1903 = vadd.f32 0.0, %v1902
  %v1904 = vpop.f32.mrb[0].mxu0
  %1905 = vdwg.mxu0
  %v1907 = vrot.slane %v1903, 4
  %v1909 = vadd.f32 %v1202, %v1907
  %v1910 = vxor.u32 %v1909, 2147483648
  %v1911 = vmul.f32 %v1910, 1.442695
  %v1912 = vpow.pop %v1911
  %v1913 = vadd.f32 %v1912, 1.0
  %v1914 = vrcp.pop %v1913
  %v1915 = vmul.f32 1.0, %v1914
  %v1916 = vtanh.pop %v1909
  %v1918 = vrot.slane %v1823, 6
  %v1920 = vmul.f32 %v1915, %v1918
  %1922 = vrot.lane.b32.xlu0 %v1916, 64
  %v1923 = vpop.permute.xlu0 %1922
  %v1925 = vmul.f32 %v1915, %v1923
  %1927 = vrot.lane.b32.xlu0 %v1925, 32
  %v1928 = vpop.permute.xlu0 %1927
  %v1930 = vadd.f32 %v1920, %v1928
  %v1931 = vtanh.pop %v1930
  %1933 = vrot.lane.b32.xlu0 %v1931, 64
  %v1934 = vpop.permute.xlu0 %1933
  %v1936 = vmul.f32 %v1915, %v1934
  %v1938 = vrot.slane %v1936, 4
  %1939 = vrot.lane.b32.xlu0 %v1938, 32
  %v1940 = vpop.permute.xlu0 %1939
  %v1941 = vsel %vm253, %v1940, 0
  %1943 = vmatprep.subr.mxu0 0.0
  %1944 = vmatpush1.msra.mxu0 %v1109
  %1945 = vmatprep.subr.mxu0 0.0
  %1946 = vmatpush1.msra.mxu0 %v1110
  %1947 = vmatprep.subr.mxu0 0.0
  %1948 = vmatpush1.msra.mxu0 %v1111
  %1949 = vmatprep.subr.mxu0 0.0
  %1950 = vmatpush1.msra.mxu0 %v1112
  %1951 = vmatprep.subr.mxu0 0.0
  %1952 = vmatpush1.msra.mxu0 0.0
  %1953 = vmatprep.subr.mxu0 0.0
  %1954 = vmatpush1.msra.mxu0 0.0
  %1955 = vmatprep.subr.mxu0 0.0
  %1956 = vmatpush1.msra.mxu0 0.0
  %1957 = vmatprep.subr.mxu0 0.0
  %1958 = vmatpush1.msra.mxu0 0.0
  %1959 = vmatprep.subr.mxu0 0.0
  %1960 = vmatpush1.msra.mxu0 0.0
  %1961 = vmatprep.subr.mxu0 0.0
  %1962 = vmatpush1.msra.mxu0 0.0
  %1963 = vmatprep.subr.mxu0 0.0
  %1964 = vmatpush1.msra.mxu0 0.0
  %1965 = vmatprep.subr.mxu0 0.0
  %1966 = vmatpush1.msra.mxu0 0.0
  %1967 = vmatprep.subr.mxu0 0.0
  %1968 = vmatpush1.msra.mxu0 0.0
  %1969 = vmatprep.subr.mxu0 0.0
  %1970 = vmatpush1.msra.mxu0 0.0
  %1971 = vmatprep.subr.mxu0 0.0
  %1972 = vmatpush1.msra.mxu0 0.0
  %1973 = vmatprep.subr.mxu0 0.0
  %1974 = vmatpush1.msra.mxu0 0.0
  %1975 = vmatprep.subr.mxu0 0.0
  %1976 = vmatpush1.msra.mxu0 0.0
  %1977 = vmatprep.subr.mxu0 0.0
  %1978 = vmatpush1.msra.mxu0 0.0
  %1979 = vmatprep.subr.mxu0 0.0
  %1980 = vmatpush1.msra.mxu0 0.0
  %1981 = vmatprep.subr.mxu0 0.0
  %1982 = vmatpush1.msra.mxu0 0.0
  %1983 = vmatprep.subr.mxu0 0.0
  %1984 = vmatpush1.msra.mxu0 0.0
  %1985 = vmatprep.subr.mxu0 0.0
  %1986 = vmatpush1.msra.mxu0 0.0
  %1987 = vmatprep.subr.mxu0 0.0
  %1988 = vmatpush1.msra.mxu0 0.0
  %1989 = vmatprep.subr.mxu0 0.0
  %1990 = vmatpush1.msra.mxu0 0.0
  %1991 = vmatprep.subr.mxu0 0.0
  %1992 = vmatpush1.msra.mxu0 0.0
  %1993 = vmatprep.subr.mxu0 0.0
  %1994 = vmatpush1.msra.mxu0 0.0
  %1995 = vmatprep.subr.mxu0 0.0
  %1996 = vmatpush1.msra.mxu0 0.0
  %1997 = vmatprep.subr.mxu0 0.0
  %1998 = vmatpush1.msra.mxu0 0.0
  %1999 = vmatprep.subr.mxu0 0.0
  %2000 = vmatpush1.msra.mxu0 0.0
  %2001 = vmatprep.subr.mxu0 0.0
  %2002 = vmatpush1.msra.mxu0 0.0
  %2003 = vmatprep.subr.mxu0 0.0
  %2004 = vmatpush1.msra.mxu0 0.0
  %2005 = vmatprep.subr.mxu0 0.0
  %2006 = vmatpush1.msra.mxu0 0.0
  %2007 = vmatprep.mubr.f32.mxu0 0.0
  %2008 = vmatmul.mubr.f32.gmra.mrb[0].mxu0 %v1941
  %v2009 = vpop.f32.mrb[0].mxu0
  %v2010 = vadd.f32 0.0, %v2009
  %v2011 = vpop.f32.mrb[0].mxu0
  %2012 = vdwg.mxu0
  %v2014 = vrot.slane %v2010, 2
  %v2016 = vadd.f32 %v1202, %v2014
  %v2017 = vxor.u32 %v2016, 2147483648
  %v2018 = vmul.f32 %v2017, 1.442695
  %v2019 = vpow.pop %v2018
  %v2020 = vadd.f32 %v2019, 1.0
  %v2021 = vrcp.pop %v2020
  %v2022 = vmul.f32 1.0, %v2021
  %v2023 = vtanh.pop %v2016
  %v2025 = vrot.slane %v1930, 6
  %v2027 = vmul.f32 %v2022, %v2025
  %2029 = vrot.lane.b32.xlu0 %v2023, 64
  %v2030 = vpop.permute.xlu0 %2029
  %v2032 = vmul.f32 %v2022, %v2030
  %2034 = vrot.lane.b32.xlu0 %v2032, 32
  %v2035 = vpop.permute.xlu0 %2034
  %v2037 = vadd.f32 %v2027, %v2035
  %v2038 = vtanh.pop %v2037
  %2040 = vrot.lane.b32.xlu0 %v2038, 64
  %v2041 = vpop.permute.xlu0 %2040
  %v2043 = vmul.f32 %v2022, %v2041
  %2045 = vrot.lane.b32.xlu0 %v1407, 64
  %v2046 = vpop.permute.xlu0 %2045
  %2048 = vrot.lane.b32.xlu0 %v1514, 96
  %v2049 = vpop.permute.xlu0 %2048
  %2053 = vrot.lane.b32.xlu0 %v1831, 64
  %v2054 = vpop.permute.xlu0 %2053
  %2056 = vrot.lane.b32.xlu0 %v1938, 96
  %v2057 = vpop.permute.xlu0 %2056
  %v2060 = vrot.slane %v2043, 6
  %v2062 = vsel %vm253, %v1302, %v2046
  %vm2063 = vcmask 523264
  %v2064 = vsel %vm2063, %v2062, %v2049
  %vm2065 = vcmask 785408
  %v2066 = vsel %vm2065, %v2064, %v1621
  %v2067 = vsel %vm253, %v1726, %v2054
  %v2068 = vsel %vm2063, %v2067, %v2057
  %v2069 = vsel %vm2065, %v2068, %v2060
  %v2072 = vcombine.low %v2066, %v2069
  %v2074 = vunpack.c.l.s4 1983009808
  %v2075 = vunpack.c.0.s8 %v2074
  %v2076 = vlaneseq
  %v2077 = vshrl.u32 %v2076, 7
  %v2078 = vsub.s32 %v2075, %v2077
  %v2079 = vrot.slane %v2072, %v2078
  %2081 = vst [vmem:[%s10] sm:$0xf] %v2079
  // Predicated region
  $region42: #{encoder_forward.1} parent=0 // pred_check
    _
  $region43: #{encoder_forward.1} parent=0 // pred_check_branch
    %2083 = sbr.rel (0) target = $region45
  $region44: #{encoder_forward.1} parent=0 // pred_region
    _
  $region45: #{encoder_forward.1} parent=0 // pred_fallthru
    _
  // Predicated region
  $region46: #{encoder_forward.1} parent=0 // pred_check
    _
  $region47: #{encoder_forward.1} parent=0 // pred_check_branch
    %2085 = sbr.rel (0) target = $region49
  $region48: #{encoder_forward.1} parent=0 // pred_region
    _
  $region49: #{encoder_forward.1} parent=0 // pred_fallthru
    _

</llo_original>
